<compile_context>
chip_gen: v7x
topology: tpu7x:2x2x1
jax: 0.10.0
libtpu: 0.0.40
codegen_flags: <defaults>
</compile_context>

<pallas_src>
import jax
import jax.numpy as jnp
from jax.experimental import pallas as pl
from jax.experimental.pallas import tpu as pltpu

BN_EPS = 1e-5
H1_REAL = 120
H2_REAL = 84
HPAD = 128           # lane-padded hidden widths in the MLP head


# ---------------------------------------------------------------------------
# Kernel 1: fused conv (transposed im2col GEMM) + bias + ReLU + 2x2 maxpool
# ---------------------------------------------------------------------------
def conv_relu_pool_kernel(p_ref, w_ref, b_ref, o_ref):
    # p_ref: (4, K, TQ)  bf16 -- 4 pool offsets x K patch feats x TQ pooled pos
    # w_ref: (Cout, K)   bf16
    # b_ref: (Cout, 1)   f32
    # o_ref: (Cout, TQ)  f32  (lane-dense output)
    w = w_ref[...]
    acc = jnp.dot(w, p_ref[0], preferred_element_type=jnp.float32)
    for i in range(1, 4):                      # static unroll over pool offsets
        acc = jnp.maximum(
            acc, jnp.dot(w, p_ref[i], preferred_element_type=jnp.float32))
    # bias + ReLU hoisted out of the max loop (mathematically identical).
    o_ref[...] = jnp.maximum(acc + b_ref[...], 0.0).astype(o_ref.dtype)


def conv_relu_pool(patches, w_t, bias):
    """patches: (4, K, Q) bf16; w_t: (Cout, K) bf16; bias: (Cout,) -> (Cout, Q) f32."""
    _, K, Q = patches.shape
    Cout = w_t.shape[0]
    if Q % 128 == 0:
        tq = 512 if Q % 512 == 0 else (256 if Q % 256 == 0 else 128)
    else:                                       # fallback: single full block
        tq = Q
    grid = (Q // tq,)
    b2 = bias.reshape(Cout, 1).astype(jnp.float32)
    return pl.pallas_call(
        conv_relu_pool_kernel,
        out_shape=jax.ShapeDtypeStruct((Cout, Q), jnp.float32),
        grid=grid,
        in_specs=[
            pl.BlockSpec((4, K, tq), lambda q: (0, 0, q)),
            pl.BlockSpec((Cout, K), lambda q: (0, 0)),
            pl.BlockSpec((Cout, 1), lambda q: (0, 0)),
        ],
        out_specs=pl.BlockSpec((Cout, tq), lambda q: (0, q)),
        compiler_params=pltpu.CompilerParams(
            dimension_semantics=("parallel",)),
    )(patches, w_t, b2)


# ---------------------------------------------------------------------------
# Kernel 2: fused fc1 + bn1 + relu + fc2 + bn2 + relu + softmax (128-lane pad)
# ---------------------------------------------------------------------------
def head_kernel(x_ref, w1_ref, b1_ref, g1_ref, be1_ref,
                w2_ref, b2_ref, g2_ref, be2_ref, o_ref):
    x = x_ref[...]                                                   # (N, 1024)
    h = jnp.dot(x, w1_ref[...], preferred_element_type=jnp.float32) + b1_ref[...]
    mu = jnp.mean(h, axis=0, keepdims=True)                          # batch stats
    var = jnp.mean((h - mu) ** 2, axis=0, keepdims=True)
    h = (h - mu) * jax.lax.rsqrt(var + BN_EPS) * g1_ref[...] + be1_ref[...]
    h = jnp.maximum(h, 0.0)                                          # (N, 128)

    h2 = jnp.dot(h, w2_ref[...], preferred_element_type=jnp.float32) + b2_ref[...]
    mu2 = jnp.mean(h2, axis=0, keepdims=True)
    var2 = jnp.mean((h2 - mu2) ** 2, axis=0, keepdims=True)
    h2 = (h2 - mu2) * jax.lax.rsqrt(var2 + BN_EPS) * g2_ref[...] + be2_ref[...]
    h2 = jnp.maximum(h2, 0.0)                                        # (N, 128)

    # mask lane-padded logits (>= 84) to -inf before the softmax
    lane = jax.lax.broadcasted_iota(jnp.int32, h2.shape, 1)
    logits = jnp.where(lane < H2_REAL, h2, -jnp.inf)
    m = jnp.max(logits, axis=-1, keepdims=True)
    e = jnp.exp(logits - m)
    denom = jnp.sum(e, axis=-1, keepdims=True)
    o_ref[...] = (e * pl.reciprocal(denom, approx=True)).astype(o_ref.dtype)


def _pad2(m, rows, cols):
    m = m.astype(jnp.float32)
    return jnp.pad(m, ((0, rows - m.shape[0]), (0, cols - m.shape[1])))


def _pad_row(v, cols):
    v = v.astype(jnp.float32).reshape(1, -1)
    return jnp.pad(v, ((0, 0), (0, cols - v.shape[1])))


def mlp_head(x, fc1_w, fc1_b, bn1_g, bn1_b, fc2_w, fc2_b, bn2_g, bn2_b):
    N, F = x.shape
    # one-time parameter relayout: transpose + zero-pad hidden dims to 128
    w1 = _pad2(fc1_w.T, F, HPAD)          # (1024, 128)
    w2 = _pad2(fc2_w.T, HPAD, HPAD)       # (128, 128)
    args = (
        x.astype(jnp.float32),
        w1, _pad_row(fc1_b, HPAD), _pad_row(bn1_g, HPAD), _pad_row(bn1_b, HPAD),
        w2, _pad_row(fc2_b, HPAD), _pad_row(bn2_g, HPAD), _pad_row(bn2_b, HPAD),
    )
    in_specs = [
        pl.BlockSpec((N, F), lambda i: (0, 0)),
        pl.BlockSpec((F, HPAD), lambda i: (0, 0)),
        pl.BlockSpec((1, HPAD), lambda i: (0, 0)),
        pl.BlockSpec((1, HPAD), lambda i: (0, 0)),
        pl.BlockSpec((1, HPAD), lambda i: (0, 0)),
        pl.BlockSpec((HPAD, HPAD), lambda i: (0, 0)),
        pl.BlockSpec((1, HPAD), lambda i: (0, 0)),
        pl.BlockSpec((1, HPAD), lambda i: (0, 0)),
        pl.BlockSpec((1, HPAD), lambda i: (0, 0)),
    ]
    out = pl.pallas_call(
        head_kernel,
        out_shape=jax.ShapeDtypeStruct((N, HPAD), jnp.float32),
        grid=(1,),
        in_specs=in_specs,
        out_specs=pl.BlockSpec((N, HPAD), lambda i: (0, 0)),
        compiler_params=pltpu.CompilerParams(
            dimension_semantics=("arbitrary",)),
    )(*args)
    return out[:, :H2_REAL]


# ---------------------------------------------------------------------------
# JAX glue: transposed im2col (pool-offset-major, K on sublanes, Q on lanes)
# ---------------------------------------------------------------------------
def im2col_pool_T(x_cnhw, ksize=5, pad=2):
    """(C, N, H, W) -> (4, K, Q) with K ordered (kh, kw, c), Q ordered (n, ho, wo).

    Axis 0 holds the four 2x2 pool offsets (dy, dx).
    """
    C, N, H, W = x_cnhw.shape
    Ho, Wo = H // 2, W // 2
    xp = jnp.pad(x_cnhw, ((0, 0), (0, 0), (pad, pad), (pad, pad)))
    cols = []
    for kh in range(ksize):
        for kw in range(ksize):
            cols.append(xp[:, :, kh:kh + H, kw:kw + W])
    pat = jnp.stack(cols, axis=0)                    # (25, C, N, H, W)
    K = ksize * ksize * C
    pat = pat.reshape(K, N, Ho, 2, Wo, 2)
    pat = pat.transpose(3, 5, 0, 1, 2, 4)            # (dy, dx, K, N, Ho, Wo)
    return pat.reshape(4, K, N * Ho * Wo)


def conv_w_to_mat_T(w_oihw):
    """PyTorch conv weight (Cout, Cin, KH, KW) -> (Cout, KH*KW*Cin), K=(kh,kw,c)."""
    Cout, Cin, KH, KW = w_oihw.shape
    return w_oihw.transpose(0, 2, 3, 1).reshape(Cout, KH * KW * Cin)


@jax.jit
def net_forward(x_nchw, params):
    N = x_nchw.shape[0]
    x = jnp.transpose(x_nchw, (1, 0, 2, 3))                  # (3, N, 32, 32)

    # conv1 + relu + maxpool1 : 32x32x3 -> 16x16x6  (output layout (C, N, H, W))
    p1 = im2col_pool_T(x, 5, 2).astype(jnp.bfloat16)          # (4, 75, N*256)
    w1 = conv_w_to_mat_T(params["conv1_w"]).astype(jnp.bfloat16)
    y1 = conv_relu_pool(p1, w1, params["conv1_b"])            # (6, N*256) f32
    y1 = y1.reshape(6, N, 16, 16)

    # conv2 + relu + maxpool2 : 16x16x6 -> 8x8x16
    p2 = im2col_pool_T(y1, 5, 2).astype(jnp.bfloat16)         # (4, 150, N*64)
    w2 = conv_w_to_mat_T(params["conv2_w"]).astype(jnp.bfloat16)
    y2 = conv_relu_pool(p2, w2, params["conv2_b"])            # (16, N*64) f32
    y2 = y2.reshape(16, N, 8, 8)

    # torch.flatten on NCHW: feature order (c, h, w)
    feat = jnp.transpose(y2, (1, 0, 2, 3)).reshape(N, 16 * 8 * 8)

    return mlp_head(
        feat,
        params["fc1_w"], params["fc1_b"], params["bn1_g"], params["bn1_b"],
        params["fc2_w"], params["fc2_b"], params["bn2_g"], params["bn2_b"],
    )


if __name__ == "__main__":
    key = jax.random.PRNGKey(0)
    keys = jax.random.split(key, 10)
    N = 2
    # Input: CIFAR-like shape implied by fc1 (16*8*8 features after two pools).
    x = jax.random.normal(keys[0], (N, 3, 32, 32), dtype=jnp.float32)

    params = {
        # PyTorch parameter shapes, deterministic synthetic values.
        "conv1_w": 0.05 * jax.random.normal(keys[1], (6, 3, 5, 5), jnp.float32),
        "conv1_b": 0.05 * jax.random.normal(keys[2], (6,), jnp.float32),
        "conv2_w": 0.05 * jax.random.normal(keys[3], (16, 6, 5, 5), jnp.float32),
        "conv2_b": 0.05 * jax.random.normal(keys[4], (16,), jnp.float32),
        "fc1_w": 0.05 * jax.random.normal(keys[5], (120, 16 * 8 * 8), jnp.float32),
        "fc1_b": 0.05 * jax.random.normal(keys[6], (120,), jnp.float32),
        "bn1_g": jnp.ones((120,), jnp.float32),
        "bn1_b": jnp.zeros((120,), jnp.float32),
        "fc2_w": 0.05 * jax.random.normal(keys[7], (84, 120), jnp.float32),
        "fc2_b": 0.05 * jax.random.normal(keys[8], (84,), jnp.float32),
        "bn2_g": jnp.ones((84,), jnp.float32),
        "bn2_b": jnp.zeros((84,), jnp.float32),
        # fc3 (84 -> 10) exists in __init__ but is never called in forward().
    }

    out = net_forward(x, params)
    out = jax.block_until_ready(out)
    assert out.shape == (N, 84)
    assert bool(jnp.all(jnp.isfinite(out)))
    # rows of a softmax sum to ~1 (approx-reciprocal used for the divide)
    assert bool(jnp.allclose(jnp.sum(out, axis=-1), 1.0, atol=1e-2))
    print("KERNEL_OK")
</pallas_src>

<mosaic_0001>
module attributes {stable_mosaic.version = 11 : i64} {
  func.func @conv_relu_pool_kernel(%arg0: i32, %arg1: memref<4x75x512xbf16, #tpu.memory_space<vmem>>, %arg2: memref<6x75xbf16, #tpu.memory_space<vmem>>, %arg3: memref<6x1xf32, #tpu.memory_space<vmem>>, %arg4: memref<6x512xf32, #tpu.memory_space<vmem>>) attributes {dimension_semantics = [#tpu.dimension_semantics<parallel>], iteration_bounds = array<i64: 1>, scalar_prefetch = 0 : i64, scratch_operands = 0 : i64, tpu.core_type = #tpu.core_type<tc>, window_params = [{transform_indices = @transform_0, window_bounds = array<i64: 4, 75, 512>}, {pipeline_mode = #tpu.pipeline_mode<synchronous>, transform_indices = @transform_1, window_bounds = array<i64: 6, 75>}, {pipeline_mode = #tpu.pipeline_mode<synchronous>, transform_indices = @transform_2, window_bounds = array<i64: 6, 1>}, {transform_indices = @transform_3, window_bounds = array<i64: 6, 512>}]} {
    %c0 = arith.constant 0 : index
    %c0_0 = arith.constant 0 : index
    %0 = vector.load %arg2[%c0, %c0_0] : memref<6x75xbf16, #tpu.memory_space<vmem>>, vector<6x75xbf16>
    %c0_1 = arith.constant 0 : index
    %c0_2 = arith.constant 0 : index
    %c0_3 = arith.constant 0 : index
    %1 = vector.load %arg1[%c0_1, %c0_2, %c0_3] : memref<4x75x512xbf16, #tpu.memory_space<vmem>>, vector<1x75x512xbf16>
    %2 = vector.shape_cast %1 : vector<1x75x512xbf16> to vector<75x512xbf16>
    %cst = arith.constant dense<0.000000e+00> : vector<6x512xf32>
    %3 = tpu.matmul %0, %2, %cst {dimension_numbers = #tpu.dot_dimension_numbers<[1], [0], [0], [1], [0, 0, 1, 1], [], []>} : vector<6x75xbf16>, vector<75x512xbf16>, vector<6x512xf32> -> vector<6x512xf32>
    %c1 = arith.constant 1 : index
    %c0_4 = arith.constant 0 : index
    %c0_5 = arith.constant 0 : index
    %4 = vector.load %arg1[%c1, %c0_4, %c0_5] : memref<4x75x512xbf16, #tpu.memory_space<vmem>>, vector<1x75x512xbf16>
    %5 = vector.shape_cast %4 : vector<1x75x512xbf16> to vector<75x512xbf16>
    %cst_6 = arith.constant dense<0.000000e+00> : vector<6x512xf32>
    %6 = tpu.matmul %0, %5, %cst_6 {dimension_numbers = #tpu.dot_dimension_numbers<[1], [0], [0], [1], [0, 0, 1, 1], [], []>} : vector<6x75xbf16>, vector<75x512xbf16>, vector<6x512xf32> -> vector<6x512xf32>
    %7 = arith.maximumf %3, %6 : vector<6x512xf32>
    %c2 = arith.constant 2 : index
    %c0_7 = arith.constant 0 : index
    %c0_8 = arith.constant 0 : index
    %8 = vector.load %arg1[%c2, %c0_7, %c0_8] : memref<4x75x512xbf16, #tpu.memory_space<vmem>>, vector<1x75x512xbf16>
    %9 = vector.shape_cast %8 : vector<1x75x512xbf16> to vector<75x512xbf16>
    %cst_9 = arith.constant dense<0.000000e+00> : vector<6x512xf32>
    %10 = tpu.matmul %0, %9, %cst_9 {dimension_numbers = #tpu.dot_dimension_numbers<[1], [0], [0], [1], [0, 0, 1, 1], [], []>} : vector<6x75xbf16>, vector<75x512xbf16>, vector<6x512xf32> -> vector<6x512xf32>
    %11 = arith.maximumf %7, %10 : vector<6x512xf32>
    %c3 = arith.constant 3 : index
    %c0_10 = arith.constant 0 : index
    %c0_11 = arith.constant 0 : index
    %12 = vector.load %arg1[%c3, %c0_10, %c0_11] : memref<4x75x512xbf16, #tpu.memory_space<vmem>>, vector<1x75x512xbf16>
    %13 = vector.shape_cast %12 : vector<1x75x512xbf16> to vector<75x512xbf16>
    %cst_12 = arith.constant dense<0.000000e+00> : vector<6x512xf32>
    %14 = tpu.matmul %0, %13, %cst_12 {dimension_numbers = #tpu.dot_dimension_numbers<[1], [0], [0], [1], [0, 0, 1, 1], [], []>} : vector<6x75xbf16>, vector<75x512xbf16>, vector<6x512xf32> -> vector<6x512xf32>
    %15 = arith.maximumf %11, %14 : vector<6x512xf32>
    %c0_13 = arith.constant 0 : index
    %c0_14 = arith.constant 0 : index
    %16 = vector.load %arg3[%c0_13, %c0_14] : memref<6x1xf32, #tpu.memory_space<vmem>>, vector<6x1xf32>
    %17 = vector.broadcast %16 : vector<6x1xf32> to vector<6x512xf32>
    %18 = arith.addf %15, %17 : vector<6x512xf32>
    %cst_15 = arith.constant 0.000000e+00 : f32
    %19 = vector.broadcast %cst_15 : f32 to vector<6x512xf32>
    %20 = arith.maximumf %18, %19 : vector<6x512xf32>
    %c0_16 = arith.constant 0 : index
    %c0_17 = arith.constant 0 : index
    %21 = vector.load %arg4[%c0_16, %c0_17] : memref<6x512xf32, #tpu.memory_space<vmem>>, vector<6x512xf32>
    tpu.vector_store %arg4[%c0_16, %c0_17], %20 {strides = array<i32>} : memref<6x512xf32, #tpu.memory_space<vmem>>, vector<6x512xf32>,
    return
  }
  func.func @transform_0(%arg0: i32) -> (i32, i32, i32) {
    %c0_i32 = arith.constant 0 : i32
    %c0_i32_0 = arith.constant 0 : i32
    %c0_i32_1 = arith.constant 0 : i32
    return %c0_i32, %c0_i32_0, %arg0 : i32, i32, i32
  }
  func.func @transform_1(%arg0: i32) -> (i32, i32) {
    %c0_i32 = arith.constant 0 : i32
    %c0_i32_0 = arith.constant 0 : i32
    %c0_i32_1 = arith.constant 0 : i32
    return %c0_i32, %c0_i32_0 : i32, i32
  }
  func.func @transform_2(%arg0: i32) -> (i32, i32) {
    %c0_i32 = arith.constant 0 : i32
    %c0_i32_0 = arith.constant 0 : i32
    %c0_i32_1 = arith.constant 0 : i32
    return %c0_i32, %c0_i32_0 : i32, i32
  }
  func.func @transform_3(%arg0: i32) -> (i32, i32) {
    %c0_i32 = arith.constant 0 : i32
    %c0_i32_0 = arith.constant 0 : i32
    return %c0_i32, %arg0 : i32, i32
  }
}

module attributes {stable_mosaic.version = 11 : i64} {
  func.func @conv_relu_pool_kernel(%arg0: i32, %arg1: memref<4x150x128xbf16, #tpu.memory_space<vmem>>, %arg2: memref<16x150xbf16, #tpu.memory_space<vmem>>, %arg3: memref<16x1xf32, #tpu.memory_space<vmem>>, %arg4: memref<16x128xf32, #tpu.memory_space<vmem>>) attributes {dimension_semantics = [#tpu.dimension_semantics<parallel>], iteration_bounds = array<i64: 1>, scalar_prefetch = 0 : i64, scratch_operands = 0 : i64, tpu.core_type = #tpu.core_type<tc>, window_params = [{transform_indices = @transform_0, window_bounds = array<i64: 4, 150, 128>}, {pipeline_mode = #tpu.pipeline_mode<synchronous>, transform_indices = @transform_1, window_bounds = array<i64: 16, 150>}, {pipeline_mode = #tpu.pipeline_mode<synchronous>, transform_indices = @transform_2, window_bounds = array<i64: 16, 1>}, {transform_indices = @transform_3, window_bounds = array<i64: 16, 128>}]} {
    %c0 = arith.constant 0 : index
    %c0_0 = arith.constant 0 : index
    %0 = vector.load %arg2[%c0, %c0_0] : memref<16x150xbf16, #tpu.memory_space<vmem>>, vector<16x150xbf16>
    %c0_1 = arith.constant 0 : index
    %c0_2 = arith.constant 0 : index
    %c0_3 = arith.constant 0 : index
    %1 = vector.load %arg1[%c0_1, %c0_2, %c0_3] : memref<4x150x128xbf16, #tpu.memory_space<vmem>>, vector<1x150x128xbf16>
    %2 = vector.shape_cast %1 : vector<1x150x128xbf16> to vector<150x128xbf16>
    %cst = arith.constant dense<0.000000e+00> : vector<16x128xf32>
    %3 = tpu.matmul %0, %2, %cst {dimension_numbers = #tpu.dot_dimension_numbers<[1], [0], [0], [1], [0, 0, 1, 1], [], []>} : vector<16x150xbf16>, vector<150x128xbf16>, vector<16x128xf32> -> vector<16x128xf32>
    %c1 = arith.constant 1 : index
    %c0_4 = arith.constant 0 : index
    %c0_5 = arith.constant 0 : index
    %4 = vector.load %arg1[%c1, %c0_4, %c0_5] : memref<4x150x128xbf16, #tpu.memory_space<vmem>>, vector<1x150x128xbf16>
    %5 = vector.shape_cast %4 : vector<1x150x128xbf16> to vector<150x128xbf16>
    %cst_6 = arith.constant dense<0.000000e+00> : vector<16x128xf32>
    %6 = tpu.matmul %0, %5, %cst_6 {dimension_numbers = #tpu.dot_dimension_numbers<[1], [0], [0], [1], [0, 0, 1, 1], [], []>} : vector<16x150xbf16>, vector<150x128xbf16>, vector<16x128xf32> -> vector<16x128xf32>
    %7 = arith.maximumf %3, %6 : vector<16x128xf32>
    %c2 = arith.constant 2 : index
    %c0_7 = arith.constant 0 : index
    %c0_8 = arith.constant 0 : index
    %8 = vector.load %arg1[%c2, %c0_7, %c0_8] : memref<4x150x128xbf16, #tpu.memory_space<vmem>>, vector<1x150x128xbf16>
    %9 = vector.shape_cast %8 : vector<1x150x128xbf16> to vector<150x128xbf16>
    %cst_9 = arith.constant dense<0.000000e+00> : vector<16x128xf32>
    %10 = tpu.matmul %0, %9, %cst_9 {dimension_numbers = #tpu.dot_dimension_numbers<[1], [0], [0], [1], [0, 0, 1, 1], [], []>} : vector<16x150xbf16>, vector<150x128xbf16>, vector<16x128xf32> -> vector<16x128xf32>
    %11 = arith.maximumf %7, %10 : vector<16x128xf32>
    %c3 = arith.constant 3 : index
    %c0_10 = arith.constant 0 : index
    %c0_11 = arith.constant 0 : index
    %12 = vector.load %arg1[%c3, %c0_10, %c0_11] : memref<4x150x128xbf16, #tpu.memory_space<vmem>>, vector<1x150x128xbf16>
    %13 = vector.shape_cast %12 : vector<1x150x128xbf16> to vector<150x128xbf16>
    %cst_12 = arith.constant dense<0.000000e+00> : vector<16x128xf32>
    %14 = tpu.matmul %0, %13, %cst_12 {dimension_numbers = #tpu.dot_dimension_numbers<[1], [0], [0], [1], [0, 0, 1, 1], [], []>} : vector<16x150xbf16>, vector<150x128xbf16>, vector<16x128xf32> -> vector<16x128xf32>
    %15 = arith.maximumf %11, %14 : vector<16x128xf32>
    %c0_13 = arith.constant 0 : index
    %c0_14 = arith.constant 0 : index
    %16 = vector.load %arg3[%c0_13, %c0_14] : memref<16x1xf32, #tpu.memory_space<vmem>>, vector<16x1xf32>
    %17 = vector.broadcast %16 : vector<16x1xf32> to vector<16x128xf32>
    %18 = arith.addf %15, %17 : vector<16x128xf32>
    %cst_15 = arith.constant 0.000000e+00 : f32
    %19 = vector.broadcast %cst_15 : f32 to vector<16x128xf32>
    %20 = arith.maximumf %18, %19 : vector<16x128xf32>
    %c0_16 = arith.constant 0 : index
    %c0_17 = arith.constant 0 : index
    %21 = vector.load %arg4[%c0_16, %c0_17] : memref<16x128xf32, #tpu.memory_space<vmem>>, vector<16x128xf32>
    tpu.vector_store %arg4[%c0_16, %c0_17], %20 {strides = array<i32>} : memref<16x128xf32, #tpu.memory_space<vmem>>, vector<16x128xf32>,
    return
  }
  func.func @transform_0(%arg0: i32) -> (i32, i32, i32) {
    %c0_i32 = arith.constant 0 : i32
    %c0_i32_0 = arith.constant 0 : i32
    %c0_i32_1 = arith.constant 0 : i32
    return %c0_i32, %c0_i32_0, %arg0 : i32, i32, i32
  }
  func.func @transform_1(%arg0: i32) -> (i32, i32) {
    %c0_i32 = arith.constant 0 : i32
    %c0_i32_0 = arith.constant 0 : i32
    %c0_i32_1 = arith.constant 0 : i32
    return %c0_i32, %c0_i32_0 : i32, i32
  }
  func.func @transform_2(%arg0: i32) -> (i32, i32) {
    %c0_i32 = arith.constant 0 : i32
    %c0_i32_0 = arith.constant 0 : i32
    %c0_i32_1 = arith.constant 0 : i32
    return %c0_i32, %c0_i32_0 : i32, i32
  }
  func.func @transform_3(%arg0: i32) -> (i32, i32) {
    %c0_i32 = arith.constant 0 : i32
    %c0_i32_0 = arith.constant 0 : i32
    return %c0_i32, %arg0 : i32, i32
  }
}

module attributes {stable_mosaic.version = 11 : i64} {
  func.func @head_kernel(%arg0: i32, %arg1: memref<2x1024xf32, #tpu.memory_space<vmem>>, %arg2: memref<1024x128xf32, #tpu.memory_space<vmem>>, %arg3: memref<1x128xf32, #tpu.memory_space<vmem>>, %arg4: memref<1x128xf32, #tpu.memory_space<vmem>>, %arg5: memref<1x128xf32, #tpu.memory_space<vmem>>, %arg6: memref<128x128xf32, #tpu.memory_space<vmem>>, %arg7: memref<1x128xf32, #tpu.memory_space<vmem>>, %arg8: memref<1x128xf32, #tpu.memory_space<vmem>>, %arg9: memref<1x128xf32, #tpu.memory_space<vmem>>, %arg10: memref<2x128xf32, #tpu.memory_space<vmem>>) attributes {dimension_semantics = [#tpu.dimension_semantics<arbitrary>], iteration_bounds = array<i64: 1>, scalar_prefetch = 0 : i64, scratch_operands = 0 : i64, tpu.core_type = #tpu.core_type<tc>, window_params = [{pipeline_mode = #tpu.pipeline_mode<synchronous>, transform_indices = @transform_0, window_bounds = array<i64: 2, 1024>}, {pipeline_mode = #tpu.pipeline_mode<synchronous>, transform_indices = @transform_1, window_bounds = array<i64: 1024, 128>}, {pipeline_mode = #tpu.pipeline_mode<synchronous>, transform_indices = @transform_2, window_bounds = array<i64: 1, 128>}, {pipeline_mode = #tpu.pipeline_mode<synchronous>, transform_indices = @transform_3, window_bounds = array<i64: 1, 128>}, {pipeline_mode = #tpu.pipeline_mode<synchronous>, transform_indices = @transform_4, window_bounds = array<i64: 1, 128>}, {pipeline_mode = #tpu.pipeline_mode<synchronous>, transform_indices = @transform_5, window_bounds = array<i64: 128, 128>}, {pipeline_mode = #tpu.pipeline_mode<synchronous>, transform_indices = @transform_6, window_bounds = array<i64: 1, 128>}, {pipeline_mode = #tpu.pipeline_mode<synchronous>, transform_indices = @transform_7, window_bounds = array<i64: 1, 128>}, {pipeline_mode = #tpu.pipeline_mode<synchronous>, transform_indices = @transform_8, window_bounds = array<i64: 1, 128>}, {pipeline_mode = #tpu.pipeline_mode<synchronous>, transform_indices = @transform_9, window_bounds = array<i64: 2, 128>}]} {
    %c0 = arith.constant 0 : index
    %c0_0 = arith.constant 0 : index
    %0 = vector.load %arg1[%c0, %c0_0] : memref<2x1024xf32, #tpu.memory_space<vmem>>, vector<2x1024xf32>
    %c0_1 = arith.constant 0 : index
    %c0_2 = arith.constant 0 : index
    %1 = vector.load %arg2[%c0_1, %c0_2] : memref<1024x128xf32, #tpu.memory_space<vmem>>, vector<1024x128xf32>
    %cst = arith.constant dense<0.000000e+00> : vector<2x128xf32>
    %2 = tpu.matmul %0, %1, %cst {dimension_numbers = #tpu.dot_dimension_numbers<[1], [0], [0], [1], [0, 0, 1, 1], [], []>} : vector<2x1024xf32>, vector<1024x128xf32>, vector<2x128xf32> -> vector<2x128xf32>
    %c0_3 = arith.constant 0 : index
    %c0_4 = arith.constant 0 : index
    %3 = vector.load %arg3[%c0_3, %c0_4] : memref<1x128xf32, #tpu.memory_space<vmem>>, vector<1x128xf32>
    %4 = vector.broadcast %3 : vector<1x128xf32> to vector<2x128xf32>
    %5 = arith.addf %2, %4 : vector<2x128xf32>
    %cst_5 = arith.constant dense<0.000000e+00> : vector<128xf32>
    %6 = vector.multi_reduction <add>, %5, %cst_5 [0] : vector<2x128xf32> to vector<128xf32>
    %7 = vector.shape_cast %6 : vector<128xf32> to vector<1x128xf32>
    %cst_6 = arith.constant 2.000000e+00 : f32
    %8 = vector.broadcast %cst_6 : f32 to vector<1x128xf32>
    %9 = arith.divf %7, %8 : vector<1x128xf32>
    %10 = vector.broadcast %9 : vector<1x128xf32> to vector<2x128xf32>
    %11 = arith.subf %5, %10 : vector<2x128xf32>
    %12 = arith.mulf %11, %11 : vector<2x128xf32>
    %cst_7 = arith.constant dense<0.000000e+00> : vector<128xf32>
    %13 = vector.multi_reduction <add>, %12, %cst_7 [0] : vector<2x128xf32> to vector<128xf32>
    %14 = vector.shape_cast %13 : vector<128xf32> to vector<1x128xf32>
    %cst_8 = arith.constant 2.000000e+00 : f32
    %15 = vector.broadcast %cst_8 : f32 to vector<1x128xf32>
    %16 = arith.divf %14, %15 : vector<1x128xf32>
    %17 = vector.broadcast %9 : vector<1x128xf32> to vector<2x128xf32>
    %18 = arith.subf %5, %17 : vector<2x128xf32>
    %cst_9 = arith.constant 9.99999974E-6 : f32
    %19 = vector.broadcast %cst_9 : f32 to vector<1x128xf32>
    %20 = arith.addf %16, %19 : vector<1x128xf32>
    %21 = math.rsqrt %20 : vector<1x128xf32>
    %22 = vector.broadcast %21 : vector<1x128xf32> to vector<2x128xf32>
    %23 = arith.mulf %18, %22 : vector<2x128xf32>
    %c0_10 = arith.constant 0 : index
    %c0_11 = arith.constant 0 : index
    %24 = vector.load %arg4[%c0_10, %c0_11] : memref<1x128xf32, #tpu.memory_space<vmem>>, vector<1x128xf32>
    %25 = vector.broadcast %24 : vector<1x128xf32> to vector<2x128xf32>
    %26 = arith.mulf %23, %25 : vector<2x128xf32>
    %c0_12 = arith.constant 0 : index
    %c0_13 = arith.constant 0 : index
    %27 = vector.load %arg5[%c0_12, %c0_13] : memref<1x128xf32, #tpu.memory_space<vmem>>, vector<1x128xf32>
    %28 = vector.broadcast %27 : vector<1x128xf32> to vector<2x128xf32>
    %29 = arith.addf %26, %28 : vector<2x128xf32>
    %cst_14 = arith.constant 0.000000e+00 : f32
    %30 = vector.broadcast %cst_14 : f32 to vector<2x128xf32>
    %31 = arith.maximumf %29, %30 : vector<2x128xf32>
    %c0_15 = arith.constant 0 : index
    %c0_16 = arith.constant 0 : index
    %32 = vector.load %arg6[%c0_15, %c0_16] : memref<128x128xf32, #tpu.memory_space<vmem>>, vector<128x128xf32>
    %cst_17 = arith.constant dense<0.000000e+00> : vector<2x128xf32>
    %33 = tpu.matmul %31, %32, %cst_17 {dimension_numbers = #tpu.dot_dimension_numbers<[1], [0], [0], [1], [0, 0, 1, 1], [], []>} : vector<2x128xf32>, vector<128x128xf32>, vector<2x128xf32> -> vector<2x128xf32>
    %c0_18 = arith.constant 0 : index
    %c0_19 = arith.constant 0 : index
    %34 = vector.load %arg7[%c0_18, %c0_19] : memref<1x128xf32, #tpu.memory_space<vmem>>, vector<1x128xf32>
    %35 = vector.broadcast %34 : vector<1x128xf32> to vector<2x128xf32>
    %36 = arith.addf %33, %35 : vector<2x128xf32>
    %cst_20 = arith.constant dense<0.000000e+00> : vector<128xf32>
    %37 = vector.multi_reduction <add>, %36, %cst_20 [0] : vector<2x128xf32> to vector<128xf32>
    %38 = vector.shape_cast %37 : vector<128xf32> to vector<1x128xf32>
    %cst_21 = arith.constant 2.000000e+00 : f32
    %39 = vector.broadcast %cst_21 : f32 to vector<1x128xf32>
    %40 = arith.divf %38, %39 : vector<1x128xf32>
    %41 = vector.broadcast %40 : vector<1x128xf32> to vector<2x128xf32>
    %42 = arith.subf %36, %41 : vector<2x128xf32>
    %43 = arith.mulf %42, %42 : vector<2x128xf32>
    %cst_22 = arith.constant dense<0.000000e+00> : vector<128xf32>
    %44 = vector.multi_reduction <add>, %43, %cst_22 [0] : vector<2x128xf32> to vector<128xf32>
    %45 = vector.shape_cast %44 : vector<128xf32> to vector<1x128xf32>
    %cst_23 = arith.constant 2.000000e+00 : f32
    %46 = vector.broadcast %cst_23 : f32 to vector<1x128xf32>
    %47 = arith.divf %45, %46 : vector<1x128xf32>
    %48 = vector.broadcast %40 : vector<1x128xf32> to vector<2x128xf32>
    %49 = arith.subf %36, %48 : vector<2x128xf32>
    %cst_24 = arith.constant 9.99999974E-6 : f32
    %50 = vector.broadcast %cst_24 : f32 to vector<1x128xf32>
    %51 = arith.addf %47, %50 : vector<1x128xf32>
    %52 = math.rsqrt %51 : vector<1x128xf32>
    %53 = vector.broadcast %52 : vector<1x128xf32> to vector<2x128xf32>
    %54 = arith.mulf %49, %53 : vector<2x128xf32>
    %c0_25 = arith.constant 0 : index
    %c0_26 = arith.constant 0 : index
    %55 = vector.load %arg8[%c0_25, %c0_26] : memref<1x128xf32, #tpu.memory_space<vmem>>, vector<1x128xf32>
    %56 = vector.broadcast %55 : vector<1x128xf32> to vector<2x128xf32>
    %57 = arith.mulf %54, %56 : vector<2x128xf32>
    %c0_27 = arith.constant 0 : index
    %c0_28 = arith.constant 0 : index
    %58 = vector.load %arg9[%c0_27, %c0_28] : memref<1x128xf32, #tpu.memory_space<vmem>>, vector<1x128xf32>
    %59 = vector.broadcast %58 : vector<1x128xf32> to vector<2x128xf32>
    %60 = arith.addf %57, %59 : vector<2x128xf32>
    %cst_29 = arith.constant 0.000000e+00 : f32
    %61 = vector.broadcast %cst_29 : f32 to vector<2x128xf32>
    %62 = arith.maximumf %60, %61 : vector<2x128xf32>
    %63 = tpu.iota {dimensions = array<i32: 1>} : vector<2x128xi32>
    %c84_i32 = arith.constant 84 : i32
    %64 = vector.broadcast %c84_i32 : i32 to vector<2x128xi32>
    %65 = arith.cmpi slt, %63, %64 : vector<2x128xi32>
    %cst_30 = arith.constant 0xFF800000 : f32
    %66 = vector.broadcast %cst_30 : f32 to vector<2x128xf32>
    %67 = arith.select %65, %62, %66 : vector<2x128xi1>, vector<2x128xf32>
    %cst_31 = arith.constant dense<0xFF800000> : vector<2xf32>
    %68 = vector.multi_reduction <maximumf>, %67, %cst_31 [1] : vector<2x128xf32> to vector<2xf32>
    %69 = vector.shape_cast %68 : vector<2xf32> to vector<2x1xf32>
    %70 = vector.broadcast %69 : vector<2x1xf32> to vector<2x128xf32>
    %71 = arith.subf %67, %70 : vector<2x128xf32>
    %72 = math.exp %71 : vector<2x128xf32>
    %cst_32 = arith.constant dense<0.000000e+00> : vector<2xf32>
    %73 = vector.multi_reduction <add>, %72, %cst_32 [1] : vector<2x128xf32> to vector<2xf32>
    %74 = vector.shape_cast %73 : vector<2xf32> to vector<2x1xf32>
    %75 = tpu.reciprocal %74 {approx = true} : vector<2x1xf32> -> vector<2x1xf32>
    %76 = vector.broadcast %75 : vector<2x1xf32> to vector<2x128xf32>
    %77 = arith.mulf %72, %76 : vector<2x128xf32>
    %c0_33 = arith.constant 0 : index
    %c0_34 = arith.constant 0 : index
    %78 = vector.load %arg10[%c0_33, %c0_34] : memref<2x128xf32, #tpu.memory_space<vmem>>, vector<2x128xf32>
    tpu.vector_store %arg10[%c0_33, %c0_34], %77 {strides = array<i32>} : memref<2x128xf32, #tpu.memory_space<vmem>>, vector<2x128xf32>,
    return
  }
  func.func @transform_0(%arg0: i32) -> (i32, i32) {
    %c0_i32 = arith.constant 0 : i32
    %c0_i32_0 = arith.constant 0 : i32
    %c0_i32_1 = arith.constant 0 : i32
    return %c0_i32, %c0_i32_0 : i32, i32
  }
  func.func @transform_1(%arg0: i32) -> (i32, i32) {
    %c0_i32 = arith.constant 0 : i32
    %c0_i32_0 = arith.constant 0 : i32
    %c0_i32_1 = arith.constant 0 : i32
    return %c0_i32, %c0_i32_0 : i32, i32
  }
  func.func @transform_2(%arg0: i32) -> (i32, i32) {
    %c0_i32 = arith.constant 0 : i32
    %c0_i32_0 = arith.constant 0 : i32
    %c0_i32_1 = arith.constant 0 : i32
    return %c0_i32, %c0_i32_0 : i32, i32
  }
  func.func @transform_3(%arg0: i32) -> (i32, i32) {
    %c0_i32 = arith.constant 0 : i32
    %c0_i32_0 = arith.constant 0 : i32
    %c0_i32_1 = arith.constant 0 : i32
    return %c0_i32, %c0_i32_0 : i32, i32
  }
  func.func @transform_4(%arg0: i32) -> (i32, i32) {
    %c0_i32 = arith.constant 0 : i32
    %c0_i32_0 = arith.constant 0 : i32
    %c0_i32_1 = arith.constant 0 : i32
    return %c0_i32, %c0_i32_0 : i32, i32
  }
  func.func @transform_5(%arg0: i32) -> (i32, i32) {
    %c0_i32 = arith.constant 0 : i32
    %c0_i32_0 = arith.constant 0 : i32
    %c0_i32_1 = arith.constant 0 : i32
    return %c0_i32, %c0_i32_0 : i32, i32
  }
  func.func @transform_6(%arg0: i32) -> (i32, i32) {
    %c0_i32 = arith.constant 0 : i32
    %c0_i32_0 = arith.constant 0 : i32
    %c0_i32_1 = arith.constant 0 : i32
    return %c0_i32, %c0_i32_0 : i32, i32
  }
  func.func @transform_7(%arg0: i32) -> (i32, i32) {
    %c0_i32 = arith.constant 0 : i32
    %c0_i32_0 = arith.constant 0 : i32
    %c0_i32_1 = arith.constant 0 : i32
    return %c0_i32, %c0_i32_0 : i32, i32
  }
  func.func @transform_8(%arg0: i32) -> (i32, i32) {
    %c0_i32 = arith.constant 0 : i32
    %c0_i32_0 = arith.constant 0 : i32
    %c0_i32_1 = arith.constant 0 : i32
    return %c0_i32, %c0_i32_0 : i32, i32
  }
  func.func @transform_9(%arg0: i32) -> (i32, i32) {
    %c0_i32 = arith.constant 0 : i32
    %c0_i32_0 = arith.constant 0 : i32
    %c0_i32_1 = arith.constant 0 : i32
    return %c0_i32, %c0_i32_0 : i32, i32
  }
}

</mosaic_0001>

<llo_original>
// kernel: net_forward.3
$region0: #{net_forward.3}
  #allocation0 [shape = 'u32[]', space=smem, size = 0x4, offset = 0x4, fixed_abs, tag = 'smem constant byte address 0x4 - core index']
  #allocation1 [shape = 'u32[144,128]{1,0:T(1,128)}', space=vmem, size = 0x12000, scoped, tag = 'internal scratch']
  %s0 = inlined_call_operand.vmem [shape: bf16[4,75,512], index: 0, kind: input, shape index: {}]
  %s1 = inlined_call_operand.vmem [shape: bf16[6,75], index: 1, kind: input, shape index: {}]
  %s2 = inlined_call_operand.vmem [shape: f32[6,1], index: 2, kind: input, shape index: {}]
  %s3 = inlined_call_operand.vmem [shape: f32[6,512], index: 3, kind: output, shape index: {}]
  %s4 = sld [smem:[#allocation0]]
  $region22: #{net_forward.3} parent=0
    _
  %s6 = ssub.s32 1, %s4
  %s7 = scalar_select 0, %s6, %s4
  // Predicated region
  $region2: #{net_forward.3} parent=0 // pred_check
    _
  $region3: #{net_forward.3} parent=0 // pred_check_branch
    %9 = sbr.rel (0) target = $region5
  $region4: #{net_forward.3} parent=0 // pred_region
    _
  $region5: #{net_forward.3} parent=0 // pred_fallthru
    _
  // Predicated region
  $region6: #{net_forward.3} parent=0 // pred_check
    _
  $region7: #{net_forward.3} parent=0 // pred_check_branch
    %11 = sbr.rel (0) target = $region9
  $region8: #{net_forward.3} parent=0 // pred_region
    _
  $region9: #{net_forward.3} parent=0 // pred_fallthru
    _
  // Predicated region
  $region10: #{net_forward.3} parent=0 // pred_check
    _
  $region11: #{net_forward.3} parent=0 // pred_check_branch
    %13 = sbr.rel (0) target = $region13
  $region12: #{net_forward.3} parent=0 // pred_region
    _
  $region13: #{net_forward.3} parent=0 // pred_fallthru
    _
  %v15 = vld [vmem:[%s1] sm:$0x7]
  %v16 = vld [vmem:[%s0] sm:$0xff]
  %v17 = vld [vmem:[%s0 + $0x8] sm:$0xff]
  %v18 = vld [vmem:[%s0 + $0x10] sm:$0xff]
  %v19 = vld [vmem:[%s0 + $0x18] sm:$0xff]
  %v20 = vld [vmem:[%s0 + $0x20] sm:$0xff]
  %v21 = vld [vmem:[%s0 + $0x28] sm:$0xff]
  %v22 = vld [vmem:[%s0 + $0x30] sm:$0xff]
  %v23 = vld [vmem:[%s0 + $0x38] sm:$0xff]
  %v24 = vld [vmem:[%s0 + $0x40] sm:$0xff]
  %v25 = vld [vmem:[%s0 + $0x48] sm:$0xff]
  %v26 = vld [vmem:[%s0 + $0x50] sm:$0xff]
  %v27 = vld [vmem:[%s0 + $0x58] sm:$0xff]
  %v28 = vld [vmem:[%s0 + $0x60] sm:$0xff]
  %v29 = vld [vmem:[%s0 + $0x68] sm:$0xff]
  %v30 = vld [vmem:[%s0 + $0x70] sm:$0xff]
  %v31 = vld [vmem:[%s0 + $0x78] sm:$0xff]
  %v32 = vld [vmem:[%s0 + $0x80] sm:$0xff]
  %v33 = vld [vmem:[%s0 + $0x88] sm:$0xff]
  %v34 = vld [vmem:[%s0 + $0x90] sm:$0x33]
  %v35 = vld [vmem:[%s0 + $0x98] sm:$0x33]
  %v56 = vunpack.c.l.b16 %v16
  %v57 = vunpack.c.h.b16 %v16
  %v58 = vunpack.c.l.b16 %v17
  %v59 = vunpack.c.h.b16 %v17
  %v60 = vunpack.c.l.b16 %v18
  %v61 = vunpack.c.h.b16 %v18
  %v62 = vunpack.c.l.b16 %v19
  %v63 = vunpack.c.h.b16 %v19
  %v64 = vunpack.c.l.b16 %v20
  %v65 = vunpack.c.h.b16 %v20
  %v66 = vunpack.c.l.b16 %v21
  %v67 = vunpack.c.h.b16 %v21
  %v68 = vunpack.c.l.b16 %v22
  %v69 = vunpack.c.h.b16 %v22
  %v70 = vunpack.c.l.b16 %v23
  %v71 = vunpack.c.h.b16 %v23
  %v72 = vunpack.c.l.b16 %v24
  %v73 = vunpack.c.h.b16 %v24
  %v74 = vunpack.c.l.b16 %v25
  %v75 = vunpack.c.h.b16 %v25
  %v76 = vunpack.c.l.b16 %v26
  %v77 = vunpack.c.h.b16 %v26
  %v78 = vunpack.c.l.b16 %v27
  %v79 = vunpack.c.h.b16 %v27
  %v80 = vunpack.c.l.b16 %v28
  %v81 = vunpack.c.h.b16 %v28
  %v82 = vunpack.c.l.b16 %v29
  %v83 = vunpack.c.h.b16 %v29
  %v84 = vunpack.c.l.b16 %v30
  %v85 = vunpack.c.h.b16 %v30
  %v86 = vunpack.c.l.b16 %v31
  %v87 = vunpack.c.h.b16 %v31
  %v88 = vunpack.c.l.b16 %v32
  %v89 = vunpack.c.h.b16 %v32
  %v90 = vunpack.c.l.b16 %v33
  %v91 = vunpack.c.h.b16 %v33
  %v92 = vunpack.c.l.b16 %v34
  %v93 = vunpack.c.h.b16 %v34
  %v94 = vunpack.c.l.b16 %v35
  %v95 = vunpack.c.h.b16 %v35
  %v96 = vpack.c.b16 %v60, %v56
  %v97 = vpack.c.b16 %v61, %v57
  %v98 = vpack.c.b16 %v62, %v58
  %v99 = vpack.c.b16 %v63, %v59
  %v100 = vpack.c.b16 %v68, %v64
  %v101 = vpack.c.b16 %v69, %v65
  %v102 = vpack.c.b16 %v70, %v66
  %v103 = vpack.c.b16 %v71, %v67
  %v104 = vpack.c.b16 %v76, %v72
  %v105 = vpack.c.b16 %v77, %v73
  %v106 = vpack.c.b16 %v78, %v74
  %v107 = vpack.c.b16 %v79, %v75
  %v108 = vpack.c.b16 %v84, %v80
  %v109 = vpack.c.b16 %v85, %v81
  %v110 = vpack.c.b16 %v86, %v82
  %v111 = vpack.c.b16 %v87, %v83
  %v112 = vpack.c.b16 %v92, %v88
  %v113 = vpack.c.b16 %v93, %v89
  %v114 = vpack.c.b16 %v94, %v90
  %v115 = vpack.c.b16 %v95, %v91
  %vm132 = vcmask 613376
  %v134 = vsel %vm132, %v15, 0
  %vm136 = vcmask 1044480
  %vm137 = vcmask 1045504
  %v138 = vsel %vm136, 4294967295, 65535
  %v139 = vsel %vm137, %v138, 0
  %v141 = vand.u32 %v112, %v139
  %v144 = vand.u32 %v113, %v139
  %v147 = vand.u32 %v114, %v139
  %v150 = vand.u32 %v115, %v139
  %152 = vmatprep.subr.bf16.mxu0 %v97
  %153 = vmatpush1.bf16.msra.mxu0 %v96
  %154 = vmatprep.subr.bf16.mxu0 %v101
  %155 = vmatpush1.bf16.msra.mxu0 %v100
  %156 = vmatprep.subr.bf16.mxu0 %v105
  %157 = vmatpush1.bf16.msra.mxu0 %v104
  %158 = vmatprep.subr.bf16.mxu0 %v109
  %159 = vmatpush1.bf16.msra.mxu0 %v108
  %160 = vmatprep.subr.bf16.mxu0 %v144
  %161 = vmatpush1.bf16.msra.mxu0 %v141
  %162 = vmatprep.subr.bf16.mxu0 0
  %163 = vmatpush1.bf16.msra.mxu0 0
  %164 = vmatprep.subr.bf16.mxu0 0
  %165 = vmatpush1.bf16.msra.mxu0 0
  %166 = vmatprep.subr.bf16.mxu0 0
  %167 = vmatpush1.bf16.msra.mxu0 0
  %168 = vmatprep.subr.bf16.mxu0 0
  %169 = vmatpush1.bf16.msra.mxu0 0
  %170 = vmatprep.subr.bf16.mxu0 0
  %171 = vmatpush1.bf16.msra.mxu0 0
  %172 = vmatprep.subr.bf16.mxu0 0
  %173 = vmatpush1.bf16.msra.mxu0 0
  %174 = vmatprep.subr.bf16.mxu0 0
  %175 = vmatpush1.bf16.msra.mxu0 0
  %176 = vmatprep.subr.bf16.mxu0 0
  %177 = vmatpush1.bf16.msra.mxu0 0
  %178 = vmatprep.subr.bf16.mxu0 0
  %179 = vmatpush1.bf16.msra.mxu0 0
  %180 = vmatprep.subr.bf16.mxu0 0
  %181 = vmatpush1.bf16.msra.mxu0 0
  %182 = vmatprep.subr.bf16.mxu0 0
  %183 = vmatpush1.bf16.msra.mxu0 0
  %184 = vmatprep.mubr.bf16.mxu0 0
  %185 = vmatmul.mubr.bf16.gmra.mrb[0].mxu0 %v134
  %v186 = vpop.f32.mrb[0].mxu0
  %v187 = vadd.f32 0.0, %v186
  %v188 = vpop.f32.mrb[0].mxu0
  %v189 = vadd.f32 0.0, %v188
  %v190 = vpop.f32.mrb[0].mxu0
  %v191 = vpop.f32.mrb[0].mxu0
  %192 = vdwg.mxu0
  %193 = vmatprep.subr.bf16.mxu0 %v99
  %194 = vmatpush1.bf16.msra.mxu0 %v98
  %195 = vmatprep.subr.bf16.mxu0 %v103
  %196 = vmatpush1.bf16.msra.mxu0 %v102
  %197 = vmatprep.subr.bf16.mxu0 %v107
  %198 = vmatpush1.bf16.msra.mxu0 %v106
  %199 = vmatprep.subr.bf16.mxu0 %v111
  %200 = vmatpush1.bf16.msra.mxu0 %v110
  %201 = vmatprep.subr.bf16.mxu0 %v150
  %202 = vmatpush1.bf16.msra.mxu0 %v147
  %203 = vmatprep.subr.bf16.mxu0 0
  %204 = vmatpush1.bf16.msra.mxu0 0
  %205 = vmatprep.subr.bf16.mxu0 0
  %206 = vmatpush1.bf16.msra.mxu0 0
  %207 = vmatprep.subr.bf16.mxu0 0
  %208 = vmatpush1.bf16.msra.mxu0 0
  %209 = vmatprep.subr.bf16.mxu0 0
  %210 = vmatpush1.bf16.msra.mxu0 0
  %211 = vmatprep.subr.bf16.mxu0 0
  %212 = vmatpush1.bf16.msra.mxu0 0
  %213 = vmatprep.subr.bf16.mxu0 0
  %214 = vmatpush1.bf16.msra.mxu0 0
  %215 = vmatprep.subr.bf16.mxu0 0
  %216 = vmatpush1.bf16.msra.mxu0 0
  %217 = vmatprep.subr.bf16.mxu0 0
  %218 = vmatpush1.bf16.msra.mxu0 0
  %219 = vmatprep.subr.bf16.mxu0 0
  %220 = vmatpush1.bf16.msra.mxu0 0
  %221 = vmatprep.subr.bf16.mxu0 0
  %222 = vmatpush1.bf16.msra.mxu0 0
  %223 = vmatprep.subr.bf16.mxu0 0
  %224 = vmatpush1.bf16.msra.mxu0 0
  %225 = vmatprep.mubr.bf16.mxu0 0
  %226 = vmatmul.mubr.bf16.gmra.mrb[0].mxu0 %v134
  %v227 = vpop.f32.mrb[0].mxu0
  %v228 = vadd.f32 0.0, %v227
  %v229 = vpop.f32.mrb[0].mxu0
  %v230 = vadd.f32 0.0, %v229
  %v231 = vpop.f32.mrb[0].mxu0
  %v232 = vpop.f32.mrb[0].mxu0
  %233 = vdwg.mxu0
  %s234 = scalar_lea.vmem %s0, 160
  %v235 = vld [vmem:[%s234] sm:$0xff]
  %v236 = vld [vmem:[%s234 + $0x8] sm:$0xff]
  %v237 = vld [vmem:[%s234 + $0x10] sm:$0xff]
  %v238 = vld [vmem:[%s234 + $0x18] sm:$0xff]
  %v239 = vld [vmem:[%s234 + $0x20] sm:$0xff]
  %v240 = vld [vmem:[%s234 + $0x28] sm:$0xff]
  %v241 = vld [vmem:[%s234 + $0x30] sm:$0xff]
  %v242 = vld [vmem:[%s234 + $0x38] sm:$0xff]
  %v243 = vld [vmem:[%s234 + $0x40] sm:$0xff]
  %v244 = vld [vmem:[%s234 + $0x48] sm:$0xff]
  %v245 = vld [vmem:[%s234 + $0x50] sm:$0xff]
  %v246 = vld [vmem:[%s234 + $0x58] sm:$0xff]
  %v247 = vld [vmem:[%s234 + $0x60] sm:$0xff]
  %v248 = vld [vmem:[%s234 + $0x68] sm:$0xff]
  %v249 = vld [vmem:[%s234 + $0x70] sm:$0xff]
  %v250 = vld [vmem:[%s234 + $0x78] sm:$0xff]
  %v251 = vld [vmem:[%s234 + $0x80] sm:$0xff]
  %v252 = vld [vmem:[%s234 + $0x88] sm:$0xff]
  %v253 = vld [vmem:[%s234 + $0x90] sm:$0x33]
  %v254 = vld [vmem:[%s234 + $0x98] sm:$0x33]
  %v275 = vunpack.c.l.b16 %v235
  %v276 = vunpack.c.h.b16 %v235
  %v277 = vunpack.c.l.b16 %v236
  %v278 = vunpack.c.h.b16 %v236
  %v279 = vunpack.c.l.b16 %v237
  %v280 = vunpack.c.h.b16 %v237
  %v281 = vunpack.c.l.b16 %v238
  %v282 = vunpack.c.h.b16 %v238
  %v283 = vunpack.c.l.b16 %v239
  %v284 = vunpack.c.h.b16 %v239
  %v285 = vunpack.c.l.b16 %v240
  %v286 = vunpack.c.h.b16 %v240
  %v287 = vunpack.c.l.b16 %v241
  %v288 = vunpack.c.h.b16 %v241
  %v289 = vunpack.c.l.b16 %v242
  %v290 = vunpack.c.h.b16 %v242
  %v291 = vunpack.c.l.b16 %v243
  %v292 = vunpack.c.h.b16 %v243
  %v293 = vunpack.c.l.b16 %v244
  %v294 = vunpack.c.h.b16 %v244
  %v295 = vunpack.c.l.b16 %v245
  %v296 = vunpack.c.h.b16 %v245
  %v297 = vunpack.c.l.b16 %v246
  %v298 = vunpack.c.h.b16 %v246
  %v299 = vunpack.c.l.b16 %v247
  %v300 = vunpack.c.h.b16 %v247
  %v301 = vunpack.c.l.b16 %v248
  %v302 = vunpack.c.h.b16 %v248
  %v303 = vunpack.c.l.b16 %v249
  %v304 = vunpack.c.h.b16 %v249
  %v305 = vunpack.c.l.b16 %v250
  %v306 = vunpack.c.h.b16 %v250
  %v307 = vunpack.c.l.b16 %v251
  %v308 = vunpack.c.h.b16 %v251
  %v309 = vunpack.c.l.b16 %v252
  %v310 = vunpack.c.h.b16 %v252
  %v311 = vunpack.c.l.b16 %v253
  %v312 = vunpack.c.h.b16 %v253
  %v313 = vunpack.c.l.b16 %v254
  %v314 = vunpack.c.h.b16 %v254
  %v315 = vpack.c.b16 %v279, %v275
  %v316 = vpack.c.b16 %v280, %v276
  %v317 = vpack.c.b16 %v281, %v277
  %v318 = vpack.c.b16 %v282, %v278
  %v319 = vpack.c.b16 %v287, %v283
  %v320 = vpack.c.b16 %v288, %v284
  %v321 = vpack.c.b16 %v289, %v285
  %v322 = vpack.c.b16 %v290, %v286
  %v323 = vpack.c.b16 %v295, %v291
  %v324 = vpack.c.b16 %v296, %v292
  %v325 = vpack.c.b16 %v297, %v293
  %v326 = vpack.c.b16 %v298, %v294
  %v327 = vpack.c.b16 %v303, %v299
  %v328 = vpack.c.b16 %v304, %v300
  %v329 = vpack.c.b16 %v305, %v301
  %v330 = vpack.c.b16 %v306, %v302
  %v331 = vpack.c.b16 %v311, %v307
  %v332 = vpack.c.b16 %v312, %v308
  %v333 = vpack.c.b16 %v313, %v309
  %v334 = vpack.c.b16 %v314, %v310
  %v352 = vand.u32 %v331, %v139
  %v355 = vand.u32 %v332, %v139
  %v358 = vand.u32 %v333, %v139
  %v361 = vand.u32 %v334, %v139
  %363 = vmatprep.subr.bf16.mxu0 %v316
  %364 = vmatpush1.bf16.msra.mxu0 %v315
  %365 = vmatprep.subr.bf16.mxu0 %v320
  %366 = vmatpush1.bf16.msra.mxu0 %v319
  %367 = vmatprep.subr.bf16.mxu0 %v324
  %368 = vmatpush1.bf16.msra.mxu0 %v323
  %369 = vmatprep.subr.bf16.mxu0 %v328
  %370 = vmatpush1.bf16.msra.mxu0 %v327
  %371 = vmatprep.subr.bf16.mxu0 %v355
  %372 = vmatpush1.bf16.msra.mxu0 %v352
  %373 = vmatprep.subr.bf16.mxu0 0
  %374 = vmatpush1.bf16.msra.mxu0 0
  %375 = vmatprep.subr.bf16.mxu0 0
  %376 = vmatpush1.bf16.msra.mxu0 0
  %377 = vmatprep.subr.bf16.mxu0 0
  %378 = vmatpush1.bf16.msra.mxu0 0
  %379 = vmatprep.subr.bf16.mxu0 0
  %380 = vmatpush1.bf16.msra.mxu0 0
  %381 = vmatprep.subr.bf16.mxu0 0
  %382 = vmatpush1.bf16.msra.mxu0 0
  %383 = vmatprep.subr.bf16.mxu0 0
  %384 = vmatpush1.bf16.msra.mxu0 0
  %385 = vmatprep.subr.bf16.mxu0 0
  %386 = vmatpush1.bf16.msra.mxu0 0
  %387 = vmatprep.subr.bf16.mxu0 0
  %388 = vmatpush1.bf16.msra.mxu0 0
  %389 = vmatprep.subr.bf16.mxu0 0
  %390 = vmatpush1.bf16.msra.mxu0 0
  %391 = vmatprep.subr.bf16.mxu0 0
  %392 = vmatpush1.bf16.msra.mxu0 0
  %393 = vmatprep.subr.bf16.mxu0 0
  %394 = vmatpush1.bf16.msra.mxu0 0
  %395 = vmatprep.mubr.bf16.mxu0 0
  %396 = vmatmul.mubr.bf16.gmra.mrb[0].mxu0 %v134
  %v397 = vpop.f32.mrb[0].mxu0
  %v398 = vadd.f32 0.0, %v397
  %v399 = vpop.f32.mrb[0].mxu0
  %v400 = vadd.f32 0.0, %v399
  %v401 = vpop.f32.mrb[0].mxu0
  %v402 = vpop.f32.mrb[0].mxu0
  %403 = vdwg.mxu0
  %404 = vmatprep.subr.bf16.mxu0 %v318
  %405 = vmatpush1.bf16.msra.mxu0 %v317
  %406 = vmatprep.subr.bf16.mxu0 %v322
  %407 = vmatpush1.bf16.msra.mxu0 %v321
  %408 = vmatprep.subr.bf16.mxu0 %v326
  %409 = vmatpush1.bf16.msra.mxu0 %v325
  %410 = vmatprep.subr.bf16.mxu0 %v330
  %411 = vmatpush1.bf16.msra.mxu0 %v329
  %412 = vmatprep.subr.bf16.mxu0 %v361
  %413 = vmatpush1.bf16.msra.mxu0 %v358
  %414 = vmatprep.subr.bf16.mxu0 0
  %415 = vmatpush1.bf16.msra.mxu0 0
  %416 = vmatprep.subr.bf16.mxu0 0
  %417 = vmatpush1.bf16.msra.mxu0 0
  %418 = vmatprep.subr.bf16.mxu0 0
  %419 = vmatpush1.bf16.msra.mxu0 0
  %420 = vmatprep.subr.bf16.mxu0 0
  %421 = vmatpush1.bf16.msra.mxu0 0
  %422 = vmatprep.subr.bf16.mxu0 0
  %423 = vmatpush1.bf16.msra.mxu0 0
  %424 = vmatprep.subr.bf16.mxu0 0
  %425 = vmatpush1.bf16.msra.mxu0 0
  %426 = vmatprep.subr.bf16.mxu0 0
  %427 = vmatpush1.bf16.msra.mxu0 0
  %428 = vmatprep.subr.bf16.mxu0 0
  %429 = vmatpush1.bf16.msra.mxu0 0
  %430 = vmatprep.subr.bf16.mxu0 0
  %431 = vmatpush1.bf16.msra.mxu0 0
  %432 = vmatprep.subr.bf16.mxu0 0
  %433 = vmatpush1.bf16.msra.mxu0 0
  %434 = vmatprep.subr.bf16.mxu0 0
  %435 = vmatpush1.bf16.msra.mxu0 0
  %436 = vmatprep.mubr.bf16.mxu0 0
  %437 = vmatmul.mubr.bf16.gmra.mrb[0].mxu0 %v134
  %v438 = vpop.f32.mrb[0].mxu0
  %v439 = vadd.f32 0.0, %v438
  %v440 = vpop.f32.mrb[0].mxu0
  %v441 = vadd.f32 0.0, %v440
  %v442 = vpop.f32.mrb[0].mxu0
  %v443 = vpop.f32.mrb[0].mxu0
  %444 = vdwg.mxu0
  %v445 = vmax.f32 %v187, %v398
  %v446 = vmax.f32 %v189, %v400
  %v447 = vmax.f32 %v228, %v439
  %v448 = vmax.f32 %v230, %v441
  %s449 = scalar_lea.vmem %s0, 320
  %v450 = vld [vmem:[%s449] sm:$0xff]
  %v451 = vld [vmem:[%s449 + $0x8] sm:$0xff]
  %v452 = vld [vmem:[%s449 + $0x10] sm:$0xff]
  %v453 = vld [vmem:[%s449 + $0x18] sm:$0xff]
  %v454 = vld [vmem:[%s449 + $0x20] sm:$0xff]
  %v455 = vld [vmem:[%s449 + $0x28] sm:$0xff]
  %v456 = vld [vmem:[%s449 + $0x30] sm:$0xff]
  %v457 = vld [vmem:[%s449 + $0x38] sm:$0xff]
  %v458 = vld [vmem:[%s449 + $0x40] sm:$0xff]
  %v459 = vld [vmem:[%s449 + $0x48] sm:$0xff]
  %v460 = vld [vmem:[%s449 + $0x50] sm:$0xff]
  %v461 = vld [vmem:[%s449 + $0x58] sm:$0xff]
  %v462 = vld [vmem:[%s449 + $0x60] sm:$0xff]
  %v463 = vld [vmem:[%s449 + $0x68] sm:$0xff]
  %v464 = vld [vmem:[%s449 + $0x70] sm:$0xff]
  %v465 = vld [vmem:[%s449 + $0x78] sm:$0xff]
  %v466 = vld [vmem:[%s449 + $0x80] sm:$0xff]
  %v467 = vld [vmem:[%s449 + $0x88] sm:$0xff]
  %v468 = vld [vmem:[%s449 + $0x90] sm:$0x33]
  %v469 = vld [vmem:[%s449 + $0x98] sm:$0x33]
  %v490 = vunpack.c.l.b16 %v450
  %v491 = vunpack.c.h.b16 %v450
  %v492 = vunpack.c.l.b16 %v451
  %v493 = vunpack.c.h.b16 %v451
  %v494 = vunpack.c.l.b16 %v452
  %v495 = vunpack.c.h.b16 %v452
  %v496 = vunpack.c.l.b16 %v453
  %v497 = vunpack.c.h.b16 %v453
  %v498 = vunpack.c.l.b16 %v454
  %v499 = vunpack.c.h.b16 %v454
  %v500 = vunpack.c.l.b16 %v455
  %v501 = vunpack.c.h.b16 %v455
  %v502 = vunpack.c.l.b16 %v456
  %v503 = vunpack.c.h.b16 %v456
  %v504 = vunpack.c.l.b16 %v457
  %v505 = vunpack.c.h.b16 %v457
  %v506 = vunpack.c.l.b16 %v458
  %v507 = vunpack.c.h.b16 %v458
  %v508 = vunpack.c.l.b16 %v459
  %v509 = vunpack.c.h.b16 %v459
  %v510 = vunpack.c.l.b16 %v460
  %v511 = vunpack.c.h.b16 %v460
  %v512 = vunpack.c.l.b16 %v461
  %v513 = vunpack.c.h.b16 %v461
  %v514 = vunpack.c.l.b16 %v462
  %v515 = vunpack.c.h.b16 %v462
  %v516 = vunpack.c.l.b16 %v463
  %v517 = vunpack.c.h.b16 %v463
  %v518 = vunpack.c.l.b16 %v464
  %v519 = vunpack.c.h.b16 %v464
  %v520 = vunpack.c.l.b16 %v465
  %v521 = vunpack.c.h.b16 %v465
  %v522 = vunpack.c.l.b16 %v466
  %v523 = vunpack.c.h.b16 %v466
  %v524 = vunpack.c.l.b16 %v467
  %v525 = vunpack.c.h.b16 %v467
  %v526 = vunpack.c.l.b16 %v468
  %v527 = vunpack.c.h.b16 %v468
  %v528 = vunpack.c.l.b16 %v469
  %v529 = vunpack.c.h.b16 %v469
  %v530 = vpack.c.b16 %v494, %v490
  %v531 = vpack.c.b16 %v495, %v491
  %v532 = vpack.c.b16 %v496, %v492
  %v533 = vpack.c.b16 %v497, %v493
  %v534 = vpack.c.b16 %v502, %v498
  %v535 = vpack.c.b16 %v503, %v499
  %v536 = vpack.c.b16 %v504, %v500
  %v537 = vpack.c.b16 %v505, %v501
  %v538 = vpack.c.b16 %v510, %v506
  %v539 = vpack.c.b16 %v511, %v507
  %v540 = vpack.c.b16 %v512, %v508
  %v541 = vpack.c.b16 %v513, %v509
  %v542 = vpack.c.b16 %v518, %v514
  %v543 = vpack.c.b16 %v519, %v515
  %v544 = vpack.c.b16 %v520, %v516
  %v545 = vpack.c.b16 %v521, %v517
  %v546 = vpack.c.b16 %v526, %v522
  %v547 = vpack.c.b16 %v527, %v523
  %v548 = vpack.c.b16 %v528, %v524
  %v549 = vpack.c.b16 %v529, %v525
  %v567 = vand.u32 %v546, %v139
  %v570 = vand.u32 %v547, %v139
  %v573 = vand.u32 %v548, %v139
  %v576 = vand.u32 %v549, %v139
  %578 = vmatprep.subr.bf16.mxu0 %v531
  %579 = vmatpush1.bf16.msra.mxu0 %v530
  %580 = vmatprep.subr.bf16.mxu0 %v535
  %581 = vmatpush1.bf16.msra.mxu0 %v534
  %582 = vmatprep.subr.bf16.mxu0 %v539
  %583 = vmatpush1.bf16.msra.mxu0 %v538
  %584 = vmatprep.subr.bf16.mxu0 %v543
  %585 = vmatpush1.bf16.msra.mxu0 %v542
  %586 = vmatprep.subr.bf16.mxu0 %v570
  %587 = vmatpush1.bf16.msra.mxu0 %v567
  %588 = vmatprep.subr.bf16.mxu0 0
  %589 = vmatpush1.bf16.msra.mxu0 0
  %590 = vmatprep.subr.bf16.mxu0 0
  %591 = vmatpush1.bf16.msra.mxu0 0
  %592 = vmatprep.subr.bf16.mxu0 0
  %593 = vmatpush1.bf16.msra.mxu0 0
  %594 = vmatprep.subr.bf16.mxu0 0
  %595 = vmatpush1.bf16.msra.mxu0 0
  %596 = vmatprep.subr.bf16.mxu0 0
  %597 = vmatpush1.bf16.msra.mxu0 0
  %598 = vmatprep.subr.bf16.mxu0 0
  %599 = vmatpush1.bf16.msra.mxu0 0
  %600 = vmatprep.subr.bf16.mxu0 0
  %601 = vmatpush1.bf16.msra.mxu0 0
  %602 = vmatprep.subr.bf16.mxu0 0
  %603 = vmatpush1.bf16.msra.mxu0 0
  %604 = vmatprep.subr.bf16.mxu0 0
  %605 = vmatpush1.bf16.msra.mxu0 0
  %606 = vmatprep.subr.bf16.mxu0 0
  %607 = vmatpush1.bf16.msra.mxu0 0
  %608 = vmatprep.subr.bf16.mxu0 0
  %609 = vmatpush1.bf16.msra.mxu0 0
  %610 = vmatprep.mubr.bf16.mxu0 0
  %611 = vmatmul.mubr.bf16.gmra.mrb[0].mxu0 %v134
  %v612 = vpop.f32.mrb[0].mxu0
  %v613 = vadd.f32 0.0, %v612
  %v614 = vpop.f32.mrb[0].mxu0
  %v615 = vadd.f32 0.0, %v614
  %v616 = vpop.f32.mrb[0].mxu0
  %v617 = vpop.f32.mrb[0].mxu0
  %618 = vdwg.mxu0
  %619 = vmatprep.subr.bf16.mxu0 %v533
  %620 = vmatpush1.bf16.msra.mxu0 %v532
  %621 = vmatprep.subr.bf16.mxu0 %v537
  %622 = vmatpush1.bf16.msra.mxu0 %v536
  %623 = vmatprep.subr.bf16.mxu0 %v541
  %624 = vmatpush1.bf16.msra.mxu0 %v540
  %625 = vmatprep.subr.bf16.mxu0 %v545
  %626 = vmatpush1.bf16.msra.mxu0 %v544
  %627 = vmatprep.subr.bf16.mxu0 %v576
  %628 = vmatpush1.bf16.msra.mxu0 %v573
  %629 = vmatprep.subr.bf16.mxu0 0
  %630 = vmatpush1.bf16.msra.mxu0 0
  %631 = vmatprep.subr.bf16.mxu0 0
  %632 = vmatpush1.bf16.msra.mxu0 0
  %633 = vmatprep.subr.bf16.mxu0 0
  %634 = vmatpush1.bf16.msra.mxu0 0
  %635 = vmatprep.subr.bf16.mxu0 0
  %636 = vmatpush1.bf16.msra.mxu0 0
  %637 = vmatprep.subr.bf16.mxu0 0
  %638 = vmatpush1.bf16.msra.mxu0 0
  %639 = vmatprep.subr.bf16.mxu0 0
  %640 = vmatpush1.bf16.msra.mxu0 0
  %641 = vmatprep.subr.bf16.mxu0 0
  %642 = vmatpush1.bf16.msra.mxu0 0
  %643 = vmatprep.subr.bf16.mxu0 0
  %644 = vmatpush1.bf16.msra.mxu0 0
  %645 = vmatprep.subr.bf16.mxu0 0
  %646 = vmatpush1.bf16.msra.mxu0 0
  %647 = vmatprep.subr.bf16.mxu0 0
  %648 = vmatpush1.bf16.msra.mxu0 0
  %649 = vmatprep.subr.bf16.mxu0 0
  %650 = vmatpush1.bf16.msra.mxu0 0
  %651 = vmatprep.mubr.bf16.mxu0 0
  %652 = vmatmul.mubr.bf16.gmra.mrb[0].mxu0 %v134
  %v653 = vpop.f32.mrb[0].mxu0
  %v654 = vadd.f32 0.0, %v653
  %v655 = vpop.f32.mrb[0].mxu0
  %v656 = vadd.f32 0.0, %v655
  %v657 = vpop.f32.mrb[0].mxu0
  %v658 = vpop.f32.mrb[0].mxu0
  %659 = vdwg.mxu0
  %v660 = vmax.f32 %v445, %v613
  %v661 = vmax.f32 %v446, %v615
  %v662 = vmax.f32 %v447, %v654
  %v663 = vmax.f32 %v448, %v656
  %s664 = scalar_lea.vmem %s0, 480
  %v665 = vld [vmem:[%s664] sm:$0xff]
  %v666 = vld [vmem:[%s664 + $0x8] sm:$0xff]
  %v667 = vld [vmem:[%s664 + $0x10] sm:$0xff]
  %v668 = vld [vmem:[%s664 + $0x18] sm:$0xff]
  %v669 = vld [vmem:[%s664 + $0x20] sm:$0xff]
  %v670 = vld [vmem:[%s664 + $0x28] sm:$0xff]
  %v671 = vld [vmem:[%s664 + $0x30] sm:$0xff]
  %v672 = vld [vmem:[%s664 + $0x38] sm:$0xff]
  %v673 = vld [vmem:[%s664 + $0x40] sm:$0xff]
  %v674 = vld [vmem:[%s664 + $0x48] sm:$0xff]
  %v675 = vld [vmem:[%s664 + $0x50] sm:$0xff]
  %v676 = vld [vmem:[%s664 + $0x58] sm:$0xff]
  %v677 = vld [vmem:[%s664 + $0x60] sm:$0xff]
  %v678 = vld [vmem:[%s664 + $0x68] sm:$0xff]
  %v679 = vld [vmem:[%s664 + $0x70] sm:$0xff]
  %v680 = vld [vmem:[%s664 + $0x78] sm:$0xff]
  %v681 = vld [vmem:[%s664 + $0x80] sm:$0xff]
  %v682 = vld [vmem:[%s664 + $0x88] sm:$0xff]
  %v683 = vld [vmem:[%s664 + $0x90] sm:$0x33]
  %v684 = vld [vmem:[%s664 + $0x98] sm:$0x33]
  %v705 = vunpack.c.l.b16 %v665
  %v706 = vunpack.c.h.b16 %v665
  %v707 = vunpack.c.l.b16 %v666
  %v708 = vunpack.c.h.b16 %v666
  %v709 = vunpack.c.l.b16 %v667
  %v710 = vunpack.c.h.b16 %v667
  %v711 = vunpack.c.l.b16 %v668
  %v712 = vunpack.c.h.b16 %v668
  %v713 = vunpack.c.l.b16 %v669
  %v714 = vunpack.c.h.b16 %v669
  %v715 = vunpack.c.l.b16 %v670
  %v716 = vunpack.c.h.b16 %v670
  %v717 = vunpack.c.l.b16 %v671
  %v718 = vunpack.c.h.b16 %v671
  %v719 = vunpack.c.l.b16 %v672
  %v720 = vunpack.c.h.b16 %v672
  %v721 = vunpack.c.l.b16 %v673
  %v722 = vunpack.c.h.b16 %v673
  %v723 = vunpack.c.l.b16 %v674
  %v724 = vunpack.c.h.b16 %v674
  %v725 = vunpack.c.l.b16 %v675
  %v726 = vunpack.c.h.b16 %v675
  %v727 = vunpack.c.l.b16 %v676
  %v728 = vunpack.c.h.b16 %v676
  %v729 = vunpack.c.l.b16 %v677
  %v730 = vunpack.c.h.b16 %v677
  %v731 = vunpack.c.l.b16 %v678
  %v732 = vunpack.c.h.b16 %v678
  %v733 = vunpack.c.l.b16 %v679
  %v734 = vunpack.c.h.b16 %v679
  %v735 = vunpack.c.l.b16 %v680
  %v736 = vunpack.c.h.b16 %v680
  %v737 = vunpack.c.l.b16 %v681
  %v738 = vunpack.c.h.b16 %v681
  %v739 = vunpack.c.l.b16 %v682
  %v740 = vunpack.c.h.b16 %v682
  %v741 = vunpack.c.l.b16 %v683
  %v742 = vunpack.c.h.b16 %v683
  %v743 = vunpack.c.l.b16 %v684
  %v744 = vunpack.c.h.b16 %v684
  %v745 = vpack.c.b16 %v709, %v705
  %v746 = vpack.c.b16 %v710, %v706
  %v747 = vpack.c.b16 %v711, %v707
  %v748 = vpack.c.b16 %v712, %v708
  %v749 = vpack.c.b16 %v717, %v713
  %v750 = vpack.c.b16 %v718, %v714
  %v751 = vpack.c.b16 %v719, %v715
  %v752 = vpack.c.b16 %v720, %v716
  %v753 = vpack.c.b16 %v725, %v721
  %v754 = vpack.c.b16 %v726, %v722
  %v755 = vpack.c.b16 %v727, %v723
  %v756 = vpack.c.b16 %v728, %v724
  %v757 = vpack.c.b16 %v733, %v729
  %v758 = vpack.c.b16 %v734, %v730
  %v759 = vpack.c.b16 %v735, %v731
  %v760 = vpack.c.b16 %v736, %v732
  %v761 = vpack.c.b16 %v741, %v737
  %v762 = vpack.c.b16 %v742, %v738
  %v763 = vpack.c.b16 %v743, %v739
  %v764 = vpack.c.b16 %v744, %v740
  %v782 = vand.u32 %v761, %v139
  %v785 = vand.u32 %v762, %v139
  %v788 = vand.u32 %v763, %v139
  %v791 = vand.u32 %v764, %v139
  %793 = vmatprep.subr.bf16.mxu0 %v746
  %794 = vmatpush1.bf16.msra.mxu0 %v745
  %795 = vmatprep.subr.bf16.mxu0 %v750
  %796 = vmatpush1.bf16.msra.mxu0 %v749
  %797 = vmatprep.subr.bf16.mxu0 %v754
  %798 = vmatpush1.bf16.msra.mxu0 %v753
  %799 = vmatprep.subr.bf16.mxu0 %v758
  %800 = vmatpush1.bf16.msra.mxu0 %v757
  %801 = vmatprep.subr.bf16.mxu0 %v785
  %802 = vmatpush1.bf16.msra.mxu0 %v782
  %803 = vmatprep.subr.bf16.mxu0 0
  %804 = vmatpush1.bf16.msra.mxu0 0
  %805 = vmatprep.subr.bf16.mxu0 0
  %806 = vmatpush1.bf16.msra.mxu0 0
  %807 = vmatprep.subr.bf16.mxu0 0
  %808 = vmatpush1.bf16.msra.mxu0 0
  %809 = vmatprep.subr.bf16.mxu0 0
  %810 = vmatpush1.bf16.msra.mxu0 0
  %811 = vmatprep.subr.bf16.mxu0 0
  %812 = vmatpush1.bf16.msra.mxu0 0
  %813 = vmatprep.subr.bf16.mxu0 0
  %814 = vmatpush1.bf16.msra.mxu0 0
  %815 = vmatprep.subr.bf16.mxu0 0
  %816 = vmatpush1.bf16.msra.mxu0 0
  %817 = vmatprep.subr.bf16.mxu0 0
  %818 = vmatpush1.bf16.msra.mxu0 0
  %819 = vmatprep.subr.bf16.mxu0 0
  %820 = vmatpush1.bf16.msra.mxu0 0
  %821 = vmatprep.subr.bf16.mxu0 0
  %822 = vmatpush1.bf16.msra.mxu0 0
  %823 = vmatprep.subr.bf16.mxu0 0
  %824 = vmatpush1.bf16.msra.mxu0 0
  %825 = vmatprep.mubr.bf16.mxu0 0
  %826 = vmatmul.mubr.bf16.gmra.mrb[0].mxu0 %v134
  %v827 = vpop.f32.mrb[0].mxu0
  %v828 = vadd.f32 0.0, %v827
  %v829 = vpop.f32.mrb[0].mxu0
  %v830 = vadd.f32 0.0, %v829
  %v831 = vpop.f32.mrb[0].mxu0
  %v832 = vpop.f32.mrb[0].mxu0
  %833 = vdwg.mxu0
  %834 = vmatprep.subr.bf16.mxu0 %v748
  %835 = vmatpush1.bf16.msra.mxu0 %v747
  %836 = vmatprep.subr.bf16.mxu0 %v752
  %837 = vmatpush1.bf16.msra.mxu0 %v751
  %838 = vmatprep.subr.bf16.mxu0 %v756
  %839 = vmatpush1.bf16.msra.mxu0 %v755
  %840 = vmatprep.subr.bf16.mxu0 %v760
  %841 = vmatpush1.bf16.msra.mxu0 %v759
  %842 = vmatprep.subr.bf16.mxu0 %v791
  %843 = vmatpush1.bf16.msra.mxu0 %v788
  %844 = vmatprep.subr.bf16.mxu0 0
  %845 = vmatpush1.bf16.msra.mxu0 0
  %846 = vmatprep.subr.bf16.mxu0 0
  %847 = vmatpush1.bf16.msra.mxu0 0
  %848 = vmatprep.subr.bf16.mxu0 0
  %849 = vmatpush1.bf16.msra.mxu0 0
  %850 = vmatprep.subr.bf16.mxu0 0
  %851 = vmatpush1.bf16.msra.mxu0 0
  %852 = vmatprep.subr.bf16.mxu0 0
  %853 = vmatpush1.bf16.msra.mxu0 0
  %854 = vmatprep.subr.bf16.mxu0 0
  %855 = vmatpush1.bf16.msra.mxu0 0
  %856 = vmatprep.subr.bf16.mxu0 0
  %857 = vmatpush1.bf16.msra.mxu0 0
  %858 = vmatprep.subr.bf16.mxu0 0
  %859 = vmatpush1.bf16.msra.mxu0 0
  %860 = vmatprep.subr.bf16.mxu0 0
  %861 = vmatpush1.bf16.msra.mxu0 0
  %862 = vmatprep.subr.bf16.mxu0 0
  %863 = vmatpush1.bf16.msra.mxu0 0
  %864 = vmatprep.subr.bf16.mxu0 0
  %865 = vmatpush1.bf16.msra.mxu0 0
  %866 = vmatprep.mubr.bf16.mxu0 0
  %867 = vmatmul.mubr.bf16.gmra.mrb[0].mxu0 %v134
  %v868 = vpop.f32.mrb[0].mxu0
  %v869 = vadd.f32 0.0, %v868
  %v870 = vpop.f32.mrb[0].mxu0
  %v871 = vadd.f32 0.0, %v870
  %v872 = vpop.f32.mrb[0].mxu0
  %v873 = vpop.f32.mrb[0].mxu0
  %874 = vdwg.mxu0
  %v875 = vmax.f32 %v660, %v828
  %v876 = vmax.f32 %v661, %v830
  %v877 = vmax.f32 %v662, %v869
  %v878 = vmax.f32 %v663, %v871
  %v879 = vld [vmem:[%s2] sm:$0x3f]
  %881 = vset.pattern.permute.xlu0 0
  %882 = vperm.xlu0 %881, %v879
  %v883 = vpop.permute.xlu0 %882
  %v885 = vadd.f32 %v875, %v883
  %v886 = vadd.f32 %v876, %v883
  %v887 = vadd.f32 %v877, %v883
  %v888 = vadd.f32 %v878, %v883
  %v889 = vmax.f32 %v885, 0.0
  %v890 = vmax.f32 %v886, 0.0
  %v891 = vmax.f32 %v887, 0.0
  %v892 = vmax.f32 %v888, 0.0
  %893 = vst [vmem:[%s3] sm:$0x3f] %v889
  %894 = vst [vmem:[%s3 + $0x8] sm:$0x3f] %v890
  %895 = vst [vmem:[%s3 + $0x10] sm:$0x3f] %v891
  %896 = vst [vmem:[%s3 + $0x18] sm:$0x3f] %v892
  // Predicated region
  $region14: #{net_forward.3} parent=0 // pred_check
    _
  $region15: #{net_forward.3} parent=0 // pred_check_branch
    %898 = sbr.rel (0) target = $region17
  $region16: #{net_forward.3} parent=0 // pred_region
    _
  $region17: #{net_forward.3} parent=0 // pred_fallthru
    _
  // Predicated region
  $region18: #{net_forward.3} parent=0 // pred_check
    _
  $region19: #{net_forward.3} parent=0 // pred_check_branch
    %900 = sbr.rel (0) target = $region21
  $region20: #{net_forward.3} parent=0 // pred_region
    _
  $region21: #{net_forward.3} parent=0 // pred_fallthru
    _

// kernel: net_forward.4
$region0: #{net_forward.4}
  #allocation0 [shape = 'u32[]', space=smem, size = 0x4, offset = 0x4, fixed_abs, tag = 'smem constant byte address 0x4 - core index']
  #allocation1 [shape = 'u32[144,128]{1,0:T(1,128)}', space=vmem, size = 0x12000, scoped, tag = 'internal scratch']
  %s0 = inlined_call_operand.vmem [shape: bf16[4,150,128], index: 0, kind: input, shape index: {}]
  %s1 = inlined_call_operand.vmem [shape: bf16[16,150], index: 1, kind: input, shape index: {}]
  %s2 = inlined_call_operand.vmem [shape: f32[16,1], index: 2, kind: input, shape index: {}]
  %s3 = inlined_call_operand.vmem [shape: f32[16,128], index: 3, kind: output, shape index: {}]
  %s4 = sld [smem:[#allocation0]]
  $region22: #{net_forward.4} parent=0
    _
  %s6 = ssub.s32 1, %s4
  %s7 = scalar_select 0, %s6, %s4
  // Predicated region
  $region2: #{net_forward.4} parent=0 // pred_check
    _
  $region3: #{net_forward.4} parent=0 // pred_check_branch
    %9 = sbr.rel (0) target = $region5
  $region4: #{net_forward.4} parent=0 // pred_region
    _
  $region5: #{net_forward.4} parent=0 // pred_fallthru
    _
  // Predicated region
  $region6: #{net_forward.4} parent=0 // pred_check
    _
  $region7: #{net_forward.4} parent=0 // pred_check_branch
    %11 = sbr.rel (0) target = $region9
  $region8: #{net_forward.4} parent=0 // pred_region
    _
  $region9: #{net_forward.4} parent=0 // pred_fallthru
    _
  // Predicated region
  $region10: #{net_forward.4} parent=0 // pred_check
    _
  $region11: #{net_forward.4} parent=0 // pred_check_branch
    %13 = sbr.rel (0) target = $region13
  $region12: #{net_forward.4} parent=0 // pred_region
    _
  $region13: #{net_forward.4} parent=0 // pred_fallthru
    _
  %v15 = vld [vmem:[%s1] sm:$0xff]
  %v16 = vld [vmem:[%s1 + $0x8] sm:$0xff]
  %v17 = vld [vmem:[%s0] sm:$0xf]
  %v18 = vld [vmem:[%s0 + $0x4] sm:$0xf]
  %v19 = vld [vmem:[%s0 + $0x8] sm:$0xf]
  %v20 = vld [vmem:[%s0 + $0xc] sm:$0xf]
  %v21 = vld [vmem:[%s0 + $0x10] sm:$0xf]
  %v22 = vld [vmem:[%s0 + $0x14] sm:$0xf]
  %v23 = vld [vmem:[%s0 + $0x18] sm:$0xf]
  %v24 = vld [vmem:[%s0 + $0x1c] sm:$0xf]
  %v25 = vld [vmem:[%s0 + $0x20] sm:$0xf]
  %v26 = vld [vmem:[%s0 + $0x24] sm:$0xf]
  %v27 = vld [vmem:[%s0 + $0x28] sm:$0xf]
  %v28 = vld [vmem:[%s0 + $0x2c] sm:$0xf]
  %v29 = vld [vmem:[%s0 + $0x30] sm:$0xf]
  %v30 = vld [vmem:[%s0 + $0x34] sm:$0xf]
  %v31 = vld [vmem:[%s0 + $0x38] sm:$0xf]
  %v32 = vld [vmem:[%s0 + $0x3c] sm:$0xf]
  %v33 = vld [vmem:[%s0 + $0x40] sm:$0xf]
  %v34 = vld [vmem:[%s0 + $0x44] sm:$0xf]
  %v35 = vld [vmem:[%s0 + $0x48] sm:$0x7]
  %v38 = vunpack.c.l.b16 %v15
  %v39 = vunpack.c.h.b16 %v15
  %v40 = vunpack.c.l.b16 %v16
  %v41 = vunpack.c.h.b16 %v16
  %v42 = vpack.c.b16 %v40, %v38
  %v43 = vpack.c.b16 %v41, %v39
  %v64 = vunpack.c.l.b16 %v17
  %v65 = vunpack.c.l.b16 %v18
  %v66 = vunpack.c.l.b16 %v19
  %v67 = vunpack.c.l.b16 %v20
  %v68 = vunpack.c.l.b16 %v21
  %v69 = vunpack.c.l.b16 %v22
  %v70 = vunpack.c.l.b16 %v23
  %v71 = vunpack.c.l.b16 %v24
  %v72 = vunpack.c.l.b16 %v25
  %v73 = vunpack.c.l.b16 %v26
  %v74 = vunpack.c.l.b16 %v27
  %v75 = vunpack.c.l.b16 %v28
  %v76 = vunpack.c.l.b16 %v29
  %v77 = vunpack.c.l.b16 %v30
  %v78 = vunpack.c.l.b16 %v31
  %v79 = vunpack.c.l.b16 %v32
  %v80 = vunpack.c.l.b16 %v33
  %v81 = vunpack.c.l.b16 %v34
  %v82 = vunpack.c.l.b16 %v35
  %v83 = vpack.c.b16 %v65, %v64
  %v84 = vpack.c.b16 %v67, %v66
  %v85 = vpack.c.b16 %v69, %v68
  %v86 = vpack.c.b16 %v71, %v70
  %v87 = vpack.c.b16 %v73, %v72
  %v88 = vpack.c.b16 %v75, %v74
  %v89 = vpack.c.b16 %v77, %v76
  %v90 = vpack.c.b16 %v79, %v78
  %v91 = vpack.c.b16 %v81, %v80
  %v92 = vpack.c.b16 %v82, %v82
  %vm102 = vcmask 179200
  %v104 = vsel %vm102, %v43, 0
  %vm106 = vcmask 1042432
  %v108 = vsel %vm106, %v92, 0
  %110 = vmatprep.subr.bf16.mxu0 0
  %111 = vmatpush1.bf16.msra.mxu0 %v83
  %112 = vmatprep.subr.bf16.mxu0 0
  %113 = vmatpush1.bf16.msra.mxu0 %v84
  %114 = vmatprep.subr.bf16.mxu0 0
  %115 = vmatpush1.bf16.msra.mxu0 %v85
  %116 = vmatprep.subr.bf16.mxu0 0
  %117 = vmatpush1.bf16.msra.mxu0 %v86
  %118 = vmatprep.subr.bf16.mxu0 0
  %119 = vmatpush1.bf16.msra.mxu0 %v87
  %120 = vmatprep.subr.bf16.mxu0 0
  %121 = vmatpush1.bf16.msra.mxu0 %v88
  %122 = vmatprep.subr.bf16.mxu0 0
  %123 = vmatpush1.bf16.msra.mxu0 %v89
  %124 = vmatprep.subr.bf16.mxu0 0
  %125 = vmatpush1.bf16.msra.mxu0 %v90
  %126 = vmatprep.subr.bf16.mxu0 0
  %127 = vmatpush1.bf16.msra.mxu0 %v91
  %128 = vmatprep.subr.bf16.mxu0 0
  %129 = vmatpush1.bf16.msra.mxu0 %v108
  %130 = vmatprep.subr.bf16.mxu0 0
  %131 = vmatpush1.bf16.msra.mxu0 0
  %132 = vmatprep.subr.bf16.mxu0 0
  %133 = vmatpush1.bf16.msra.mxu0 0
  %134 = vmatprep.subr.bf16.mxu0 0
  %135 = vmatpush1.bf16.msra.mxu0 0
  %136 = vmatprep.subr.bf16.mxu0 0
  %137 = vmatpush1.bf16.msra.mxu0 0
  %138 = vmatprep.subr.bf16.mxu0 0
  %139 = vmatpush1.bf16.msra.mxu0 0
  %140 = vmatprep.subr.bf16.mxu0 0
  %141 = vmatpush1.bf16.msra.mxu0 0
  %142 = vmatprep.mubr.bf16.mxu0 %v104
  %143 = vmatmul.mubr.bf16.gmra.mrb[0].mxu0 %v42
  %v144 = vpop.f32.mrb[0].mxu0
  %v145 = vadd.f32 0.0, %v144
  %v146 = vpop.f32.mrb[0].mxu0
  %v147 = vpop.f32.mrb[0].mxu0
  %v148 = vadd.f32 0.0, %v147
  %v149 = vpop.f32.mrb[0].mxu0
  %150 = vdwg.mxu0
  %s151 = scalar_lea.vmem %s0, 76
  %v152 = vld [vmem:[%s151] sm:$0xf]
  %v153 = vld [vmem:[%s151 + $0x4] sm:$0xf]
  %v154 = vld [vmem:[%s151 + $0x8] sm:$0xf]
  %v155 = vld [vmem:[%s151 + $0xc] sm:$0xf]
  %v156 = vld [vmem:[%s151 + $0x10] sm:$0xf]
  %v157 = vld [vmem:[%s151 + $0x14] sm:$0xf]
  %v158 = vld [vmem:[%s151 + $0x18] sm:$0xf]
  %v159 = vld [vmem:[%s151 + $0x1c] sm:$0xf]
  %v160 = vld [vmem:[%s151 + $0x20] sm:$0xf]
  %v161 = vld [vmem:[%s151 + $0x24] sm:$0xf]
  %v162 = vld [vmem:[%s151 + $0x28] sm:$0xf]
  %v163 = vld [vmem:[%s151 + $0x2c] sm:$0xf]
  %v164 = vld [vmem:[%s151 + $0x30] sm:$0xf]
  %v165 = vld [vmem:[%s151 + $0x34] sm:$0xf]
  %v166 = vld [vmem:[%s151 + $0x38] sm:$0xf]
  %v167 = vld [vmem:[%s151 + $0x3c] sm:$0xf]
  %v168 = vld [vmem:[%s151 + $0x40] sm:$0xf]
  %v169 = vld [vmem:[%s151 + $0x44] sm:$0xf]
  %v170 = vld [vmem:[%s151 + $0x48] sm:$0x7]
  %v190 = vunpack.c.l.b16 %v152
  %v191 = vunpack.c.l.b16 %v153
  %v192 = vunpack.c.l.b16 %v154
  %v193 = vunpack.c.l.b16 %v155
  %v194 = vunpack.c.l.b16 %v156
  %v195 = vunpack.c.l.b16 %v157
  %v196 = vunpack.c.l.b16 %v158
  %v197 = vunpack.c.l.b16 %v159
  %v198 = vunpack.c.l.b16 %v160
  %v199 = vunpack.c.l.b16 %v161
  %v200 = vunpack.c.l.b16 %v162
  %v201 = vunpack.c.l.b16 %v163
  %v202 = vunpack.c.l.b16 %v164
  %v203 = vunpack.c.l.b16 %v165
  %v204 = vunpack.c.l.b16 %v166
  %v205 = vunpack.c.l.b16 %v167
  %v206 = vunpack.c.l.b16 %v168
  %v207 = vunpack.c.l.b16 %v169
  %v208 = vunpack.c.l.b16 %v170
  %v209 = vpack.c.b16 %v191, %v190
  %v210 = vpack.c.b16 %v193, %v192
  %v211 = vpack.c.b16 %v195, %v194
  %v212 = vpack.c.b16 %v197, %v196
  %v213 = vpack.c.b16 %v199, %v198
  %v214 = vpack.c.b16 %v201, %v200
  %v215 = vpack.c.b16 %v203, %v202
  %v216 = vpack.c.b16 %v205, %v204
  %v217 = vpack.c.b16 %v207, %v206
  %v218 = vpack.c.b16 %v208, %v208
  %v229 = vsel %vm106, %v218, 0
  %231 = vmatprep.subr.bf16.mxu0 0
  %232 = vmatpush1.bf16.msra.mxu0 %v209
  %233 = vmatprep.subr.bf16.mxu0 0
  %234 = vmatpush1.bf16.msra.mxu0 %v210
  %235 = vmatprep.subr.bf16.mxu0 0
  %236 = vmatpush1.bf16.msra.mxu0 %v211
  %237 = vmatprep.subr.bf16.mxu0 0
  %238 = vmatpush1.bf16.msra.mxu0 %v212
  %239 = vmatprep.subr.bf16.mxu0 0
  %240 = vmatpush1.bf16.msra.mxu0 %v213
  %241 = vmatprep.subr.bf16.mxu0 0
  %242 = vmatpush1.bf16.msra.mxu0 %v214
  %243 = vmatprep.subr.bf16.mxu0 0
  %244 = vmatpush1.bf16.msra.mxu0 %v215
  %245 = vmatprep.subr.bf16.mxu0 0
  %246 = vmatpush1.bf16.msra.mxu0 %v216
  %247 = vmatprep.subr.bf16.mxu0 0
  %248 = vmatpush1.bf16.msra.mxu0 %v217
  %249 = vmatprep.subr.bf16.mxu0 0
  %250 = vmatpush1.bf16.msra.mxu0 %v229
  %251 = vmatprep.subr.bf16.mxu0 0
  %252 = vmatpush1.bf16.msra.mxu0 0
  %253 = vmatprep.subr.bf16.mxu0 0
  %254 = vmatpush1.bf16.msra.mxu0 0
  %255 = vmatprep.subr.bf16.mxu0 0
  %256 = vmatpush1.bf16.msra.mxu0 0
  %257 = vmatprep.subr.bf16.mxu0 0
  %258 = vmatpush1.bf16.msra.mxu0 0
  %259 = vmatprep.subr.bf16.mxu0 0
  %260 = vmatpush1.bf16.msra.mxu0 0
  %261 = vmatprep.subr.bf16.mxu0 0
  %262 = vmatpush1.bf16.msra.mxu0 0
  %263 = vmatprep.mubr.bf16.mxu0 %v104
  %264 = vmatmul.mubr.bf16.gmra.mrb[0].mxu0 %v42
  %v265 = vpop.f32.mrb[0].mxu0
  %v266 = vadd.f32 0.0, %v265
  %v267 = vpop.f32.mrb[0].mxu0
  %v268 = vpop.f32.mrb[0].mxu0
  %v269 = vadd.f32 0.0, %v268
  %v270 = vpop.f32.mrb[0].mxu0
  %271 = vdwg.mxu0
  %v272 = vmax.f32 %v145, %v266
  %v273 = vmax.f32 %v148, %v269
  %s274 = scalar_lea.vmem %s0, 152
  %v275 = vld [vmem:[%s274] sm:$0xf]
  %v276 = vld [vmem:[%s274 + $0x4] sm:$0xf]
  %v277 = vld [vmem:[%s274 + $0x8] sm:$0xf]
  %v278 = vld [vmem:[%s274 + $0xc] sm:$0xf]
  %v279 = vld [vmem:[%s274 + $0x10] sm:$0xf]
  %v280 = vld [vmem:[%s274 + $0x14] sm:$0xf]
  %v281 = vld [vmem:[%s274 + $0x18] sm:$0xf]
  %v282 = vld [vmem:[%s274 + $0x1c] sm:$0xf]
  %v283 = vld [vmem:[%s274 + $0x20] sm:$0xf]
  %v284 = vld [vmem:[%s274 + $0x24] sm:$0xf]
  %v285 = vld [vmem:[%s274 + $0x28] sm:$0xf]
  %v286 = vld [vmem:[%s274 + $0x2c] sm:$0xf]
  %v287 = vld [vmem:[%s274 + $0x30] sm:$0xf]
  %v288 = vld [vmem:[%s274 + $0x34] sm:$0xf]
  %v289 = vld [vmem:[%s274 + $0x38] sm:$0xf]
  %v290 = vld [vmem:[%s274 + $0x3c] sm:$0xf]
  %v291 = vld [vmem:[%s274 + $0x40] sm:$0xf]
  %v292 = vld [vmem:[%s274 + $0x44] sm:$0xf]
  %v293 = vld [vmem:[%s274 + $0x48] sm:$0x7]
  %v313 = vunpack.c.l.b16 %v275
  %v314 = vunpack.c.l.b16 %v276
  %v315 = vunpack.c.l.b16 %v277
  %v316 = vunpack.c.l.b16 %v278
  %v317 = vunpack.c.l.b16 %v279
  %v318 = vunpack.c.l.b16 %v280
  %v319 = vunpack.c.l.b16 %v281
  %v320 = vunpack.c.l.b16 %v282
  %v321 = vunpack.c.l.b16 %v283
  %v322 = vunpack.c.l.b16 %v284
  %v323 = vunpack.c.l.b16 %v285
  %v324 = vunpack.c.l.b16 %v286
  %v325 = vunpack.c.l.b16 %v287
  %v326 = vunpack.c.l.b16 %v288
  %v327 = vunpack.c.l.b16 %v289
  %v328 = vunpack.c.l.b16 %v290
  %v329 = vunpack.c.l.b16 %v291
  %v330 = vunpack.c.l.b16 %v292
  %v331 = vunpack.c.l.b16 %v293
  %v332 = vpack.c.b16 %v314, %v313
  %v333 = vpack.c.b16 %v316, %v315
  %v334 = vpack.c.b16 %v318, %v317
  %v335 = vpack.c.b16 %v320, %v319
  %v336 = vpack.c.b16 %v322, %v321
  %v337 = vpack.c.b16 %v324, %v323
  %v338 = vpack.c.b16 %v326, %v325
  %v339 = vpack.c.b16 %v328, %v327
  %v340 = vpack.c.b16 %v330, %v329
  %v341 = vpack.c.b16 %v331, %v331
  %v352 = vsel %vm106, %v341, 0
  %354 = vmatprep.subr.bf16.mxu0 0
  %355 = vmatpush1.bf16.msra.mxu0 %v332
  %356 = vmatprep.subr.bf16.mxu0 0
  %357 = vmatpush1.bf16.msra.mxu0 %v333
  %358 = vmatprep.subr.bf16.mxu0 0
  %359 = vmatpush1.bf16.msra.mxu0 %v334
  %360 = vmatprep.subr.bf16.mxu0 0
  %361 = vmatpush1.bf16.msra.mxu0 %v335
  %362 = vmatprep.subr.bf16.mxu0 0
  %363 = vmatpush1.bf16.msra.mxu0 %v336
  %364 = vmatprep.subr.bf16.mxu0 0
  %365 = vmatpush1.bf16.msra.mxu0 %v337
  %366 = vmatprep.subr.bf16.mxu0 0
  %367 = vmatpush1.bf16.msra.mxu0 %v338
  %368 = vmatprep.subr.bf16.mxu0 0
  %369 = vmatpush1.bf16.msra.mxu0 %v339
  %370 = vmatprep.subr.bf16.mxu0 0
  %371 = vmatpush1.bf16.msra.mxu0 %v340
  %372 = vmatprep.subr.bf16.mxu0 0
  %373 = vmatpush1.bf16.msra.mxu0 %v352
  %374 = vmatprep.subr.bf16.mxu0 0
  %375 = vmatpush1.bf16.msra.mxu0 0
  %376 = vmatprep.subr.bf16.mxu0 0
  %377 = vmatpush1.bf16.msra.mxu0 0
  %378 = vmatprep.subr.bf16.mxu0 0
  %379 = vmatpush1.bf16.msra.mxu0 0
  %380 = vmatprep.subr.bf16.mxu0 0
  %381 = vmatpush1.bf16.msra.mxu0 0
  %382 = vmatprep.subr.bf16.mxu0 0
  %383 = vmatpush1.bf16.msra.mxu0 0
  %384 = vmatprep.subr.bf16.mxu0 0
  %385 = vmatpush1.bf16.msra.mxu0 0
  %386 = vmatprep.mubr.bf16.mxu0 %v104
  %387 = vmatmul.mubr.bf16.gmra.mrb[0].mxu0 %v42
  %v388 = vpop.f32.mrb[0].mxu0
  %v389 = vadd.f32 0.0, %v388
  %v390 = vpop.f32.mrb[0].mxu0
  %v391 = vpop.f32.mrb[0].mxu0
  %v392 = vadd.f32 0.0, %v391
  %v393 = vpop.f32.mrb[0].mxu0
  %394 = vdwg.mxu0
  %v395 = vmax.f32 %v272, %v389
  %v396 = vmax.f32 %v273, %v392
  %s397 = scalar_lea.vmem %s0, 228
  %v398 = vld [vmem:[%s397] sm:$0xf]
  %v399 = vld [vmem:[%s397 + $0x4] sm:$0xf]
  %v400 = vld [vmem:[%s397 + $0x8] sm:$0xf]
  %v401 = vld [vmem:[%s397 + $0xc] sm:$0xf]
  %v402 = vld [vmem:[%s397 + $0x10] sm:$0xf]
  %v403 = vld [vmem:[%s397 + $0x14] sm:$0xf]
  %v404 = vld [vmem:[%s397 + $0x18] sm:$0xf]
  %v405 = vld [vmem:[%s397 + $0x1c] sm:$0xf]
  %v406 = vld [vmem:[%s397 + $0x20] sm:$0xf]
  %v407 = vld [vmem:[%s397 + $0x24] sm:$0xf]
  %v408 = vld [vmem:[%s397 + $0x28] sm:$0xf]
  %v409 = vld [vmem:[%s397 + $0x2c] sm:$0xf]
  %v410 = vld [vmem:[%s397 + $0x30] sm:$0xf]
  %v411 = vld [vmem:[%s397 + $0x34] sm:$0xf]
  %v412 = vld [vmem:[%s397 + $0x38] sm:$0xf]
  %v413 = vld [vmem:[%s397 + $0x3c] sm:$0xf]
  %v414 = vld [vmem:[%s397 + $0x40] sm:$0xf]
  %v415 = vld [vmem:[%s397 + $0x44] sm:$0xf]
  %v416 = vld [vmem:[%s397 + $0x48] sm:$0x7]
  %v436 = vunpack.c.l.b16 %v398
  %v437 = vunpack.c.l.b16 %v399
  %v438 = vunpack.c.l.b16 %v400
  %v439 = vunpack.c.l.b16 %v401
  %v440 = vunpack.c.l.b16 %v402
  %v441 = vunpack.c.l.b16 %v403
  %v442 = vunpack.c.l.b16 %v404
  %v443 = vunpack.c.l.b16 %v405
  %v444 = vunpack.c.l.b16 %v406
  %v445 = vunpack.c.l.b16 %v407
  %v446 = vunpack.c.l.b16 %v408
  %v447 = vunpack.c.l.b16 %v409
  %v448 = vunpack.c.l.b16 %v410
  %v449 = vunpack.c.l.b16 %v411
  %v450 = vunpack.c.l.b16 %v412
  %v451 = vunpack.c.l.b16 %v413
  %v452 = vunpack.c.l.b16 %v414
  %v453 = vunpack.c.l.b16 %v415
  %v454 = vunpack.c.l.b16 %v416
  %v455 = vpack.c.b16 %v437, %v436
  %v456 = vpack.c.b16 %v439, %v438
  %v457 = vpack.c.b16 %v441, %v440
  %v458 = vpack.c.b16 %v443, %v442
  %v459 = vpack.c.b16 %v445, %v444
  %v460 = vpack.c.b16 %v447, %v446
  %v461 = vpack.c.b16 %v449, %v448
  %v462 = vpack.c.b16 %v451, %v450
  %v463 = vpack.c.b16 %v453, %v452
  %v464 = vpack.c.b16 %v454, %v454
  %v475 = vsel %vm106, %v464, 0
  %477 = vmatprep.subr.bf16.mxu0 0
  %478 = vmatpush1.bf16.msra.mxu0 %v455
  %479 = vmatprep.subr.bf16.mxu0 0
  %480 = vmatpush1.bf16.msra.mxu0 %v456
  %481 = vmatprep.subr.bf16.mxu0 0
  %482 = vmatpush1.bf16.msra.mxu0 %v457
  %483 = vmatprep.subr.bf16.mxu0 0
  %484 = vmatpush1.bf16.msra.mxu0 %v458
  %485 = vmatprep.subr.bf16.mxu0 0
  %486 = vmatpush1.bf16.msra.mxu0 %v459
  %487 = vmatprep.subr.bf16.mxu0 0
  %488 = vmatpush1.bf16.msra.mxu0 %v460
  %489 = vmatprep.subr.bf16.mxu0 0
  %490 = vmatpush1.bf16.msra.mxu0 %v461
  %491 = vmatprep.subr.bf16.mxu0 0
  %492 = vmatpush1.bf16.msra.mxu0 %v462
  %493 = vmatprep.subr.bf16.mxu0 0
  %494 = vmatpush1.bf16.msra.mxu0 %v463
  %495 = vmatprep.subr.bf16.mxu0 0
  %496 = vmatpush1.bf16.msra.mxu0 %v475
  %497 = vmatprep.subr.bf16.mxu0 0
  %498 = vmatpush1.bf16.msra.mxu0 0
  %499 = vmatprep.subr.bf16.mxu0 0
  %500 = vmatpush1.bf16.msra.mxu0 0
  %501 = vmatprep.subr.bf16.mxu0 0
  %502 = vmatpush1.bf16.msra.mxu0 0
  %503 = vmatprep.subr.bf16.mxu0 0
  %504 = vmatpush1.bf16.msra.mxu0 0
  %505 = vmatprep.subr.bf16.mxu0 0
  %506 = vmatpush1.bf16.msra.mxu0 0
  %507 = vmatprep.subr.bf16.mxu0 0
  %508 = vmatpush1.bf16.msra.mxu0 0
  %509 = vmatprep.mubr.bf16.mxu0 %v104
  %510 = vmatmul.mubr.bf16.gmra.mrb[0].mxu0 %v42
  %v511 = vpop.f32.mrb[0].mxu0
  %v512 = vadd.f32 0.0, %v511
  %v513 = vpop.f32.mrb[0].mxu0
  %v514 = vpop.f32.mrb[0].mxu0
  %v515 = vadd.f32 0.0, %v514
  %v516 = vpop.f32.mrb[0].mxu0
  %517 = vdwg.mxu0
  %v518 = vmax.f32 %v395, %v512
  %v519 = vmax.f32 %v396, %v515
  %v520 = vld [vmem:[%s2] sm:$0xff]
  %v521 = vld [vmem:[%s2 + $0x8] sm:$0xff]
  %523 = vset.pattern.permute.xlu0 0
  %524 = vperm.xlu0 %523, %v520
  %v525 = vpop.permute.xlu0 %524
  %528 = vset.pattern.permute.xlu0 0
  %529 = vperm.xlu0 %528, %v521
  %v530 = vpop.permute.xlu0 %529
  %v532 = vadd.f32 %v518, %v525
  %v533 = vadd.f32 %v519, %v530
  %v534 = vmax.f32 %v532, 0.0
  %v535 = vmax.f32 %v533, 0.0
  %536 = vst [vmem:[%s3] sm:$0xff] %v534
  %537 = vst [vmem:[%s3 + $0x8] sm:$0xff] %v535
  // Predicated region
  $region14: #{net_forward.4} parent=0 // pred_check
    _
  $region15: #{net_forward.4} parent=0 // pred_check_branch
    %539 = sbr.rel (0) target = $region17
  $region16: #{net_forward.4} parent=0 // pred_region
    _
  $region17: #{net_forward.4} parent=0 // pred_fallthru
    _
  // Predicated region
  $region18: #{net_forward.4} parent=0 // pred_check
    _
  $region19: #{net_forward.4} parent=0 // pred_check_branch
    %541 = sbr.rel (0) target = $region21
  $region20: #{net_forward.4} parent=0 // pred_region
    _
  $region21: #{net_forward.4} parent=0 // pred_fallthru
    _

// kernel: net_forward.5
$region0: #{net_forward.5}
  #allocation0 [shape = 'u32[]', space=smem, size = 0x4, offset = 0x4, fixed_abs, tag = 'smem constant byte address 0x4 - core index']
  #allocation1 [shape = 'u32[144,128]{1,0:T(1,128)}', space=vmem, size = 0x12000, scoped, tag = 'internal scratch']
  %s0 = inlined_call_operand.vmem [shape: f32[2,1024], index: 0, kind: input, shape index: {}]
  %s1 = inlined_call_operand.vmem [shape: f32[1024,128], index: 1, kind: input, shape index: {}]
  %s2 = inlined_call_operand.vmem [shape: f32[1,128], index: 2, kind: input, shape index: {}]
  %s3 = inlined_call_operand.vmem [shape: f32[1,128], index: 3, kind: input, shape index: {}]
  %s4 = inlined_call_operand.vmem [shape: f32[1,128], index: 4, kind: input, shape index: {}]
  %s5 = inlined_call_operand.vmem [shape: f32[128,128], index: 5, kind: input, shape index: {}]
  %s6 = inlined_call_operand.vmem [shape: f32[1,128], index: 6, kind: input, shape index: {}]
  %s7 = inlined_call_operand.vmem [shape: f32[1,128], index: 7, kind: input, shape index: {}]
  %s8 = inlined_call_operand.vmem [shape: f32[1,128], index: 8, kind: input, shape index: {}]
  %s9 = inlined_call_operand.hbm [shape: f32[2,128], index: 9, kind: output, shape index: {}]
  %s10 = sld [smem:[#allocation0]]
  $region46: #{net_forward.5} parent=0
    _
  %s12 = ssub.s32 1, %s10
  %s13 = scalar_select 0, %s12, %s10
  $region1: #{net_forward.5} parent=0
    #allocation2 [shape = 'u8[1024]{0}', space=vmem, size = 0x400, scoped, tag = 'output window, operand 0, single buffered']
    #allocation3 [shape = 's32[1]{0}', space=sflag, size = 0x4, scoped, tag = 'scoped memory for net_forward.5']
    %14 = vsyncpa [#allocation3], 0
    // Predicated region
    $region2: #{net_forward.5} parent=1 // pred_check
      _
    $region3: #{net_forward.5} parent=1 // pred_check_branch
      %16 = sbr.rel (0) target = $region5
    $region4: #{net_forward.5} parent=1 // pred_region
      _
    $region5: #{net_forward.5} parent=1 // pred_fallthru
      _
    // Predicated region
    $region6: #{net_forward.5} parent=1 // pred_check
      _
    $region7: #{net_forward.5} parent=1 // pred_check_branch
      %18 = sbr.rel (0) target = $region9
    $region8: #{net_forward.5} parent=1 // pred_region
      _
    $region9: #{net_forward.5} parent=1 // pred_fallthru
      _
    // Predicated region
    $region10: #{net_forward.5} parent=1 // pred_check
      _
    $region11: #{net_forward.5} parent=1 // pred_check_branch
      %20 = sbr.rel (0) target = $region13
    $region12: #{net_forward.5} parent=1 // pred_region
      _
    $region13: #{net_forward.5} parent=1 // pred_fallthru
      _
    // Predicated region
    $region14: #{net_forward.5} parent=1 // pred_check
      _
    $region15: #{net_forward.5} parent=1 // pred_check_branch
      %22 = sbr.rel (0) target = $region17
    $region16: #{net_forward.5} parent=1 // pred_region
      _
    $region17: #{net_forward.5} parent=1 // pred_fallthru
      _
    // Predicated region
    $region18: #{net_forward.5} parent=1 // pred_check
      _
    $region19: #{net_forward.5} parent=1 // pred_check_branch
      %24 = sbr.rel (0) target = $region21
    $region20: #{net_forward.5} parent=1 // pred_region
      _
    $region21: #{net_forward.5} parent=1 // pred_fallthru
      _
    // Predicated region
    $region22: #{net_forward.5} parent=1 // pred_check
      _
    $region23: #{net_forward.5} parent=1 // pred_check_branch
      %26 = sbr.rel (0) target = $region25
    $region24: #{net_forward.5} parent=1 // pred_region
      _
    $region25: #{net_forward.5} parent=1 // pred_fallthru
      _
    // Predicated region
    $region26: #{net_forward.5} parent=1 // pred_check
      _
    $region27: #{net_forward.5} parent=1 // pred_check_branch
      %28 = sbr.rel (0) target = $region29
    $region28: #{net_forward.5} parent=1 // pred_region
      _
    $region29: #{net_forward.5} parent=1 // pred_fallthru
      _
    // Predicated region
    $region30: #{net_forward.5} parent=1 // pred_check
      _
    $region31: #{net_forward.5} parent=1 // pred_check_branch
      %30 = sbr.rel (0) target = $region33
    $region32: #{net_forward.5} parent=1 // pred_region
      _
    $region33: #{net_forward.5} parent=1 // pred_fallthru
      _
    // Predicated region
    $region34: #{net_forward.5} parent=1 // pred_check
      _
    $region35: #{net_forward.5} parent=1 // pred_check_branch
      %32 = sbr.rel (0) target = $region37
    $region36: #{net_forward.5} parent=1 // pred_region
      _
    $region37: #{net_forward.5} parent=1 // pred_fallthru
      _
    %v33 = vld [vmem:[%s0] sm:$0xff]
    %v34 = vld [vmem:[%s0 + $0x8] sm:$0xff]
    %v35 = vld [vmem:[%s1] sm:$0xff]
    %v36 = vld [vmem:[%s1 + $0x8] sm:$0xff]
    %v37 = vld [vmem:[%s1 + $0x10] sm:$0xff]
    %v38 = vld [vmem:[%s1 + $0x18] sm:$0xff]
    %v39 = vld [vmem:[%s1 + $0x20] sm:$0xff]
    %v40 = vld [vmem:[%s1 + $0x28] sm:$0xff]
    %v41 = vld [vmem:[%s1 + $0x30] sm:$0xff]
    %v42 = vld [vmem:[%s1 + $0x38] sm:$0xff]
    %v43 = vld [vmem:[%s1 + $0x40] sm:$0xff]
    %v44 = vld [vmem:[%s1 + $0x48] sm:$0xff]
    %v45 = vld [vmem:[%s1 + $0x50] sm:$0xff]
    %v46 = vld [vmem:[%s1 + $0x58] sm:$0xff]
    %v47 = vld [vmem:[%s1 + $0x60] sm:$0xff]
    %v48 = vld [vmem:[%s1 + $0x68] sm:$0xff]
    %v49 = vld [vmem:[%s1 + $0x70] sm:$0xff]
    %v50 = vld [vmem:[%s1 + $0x78] sm:$0xff]
    %v51 = vld [vmem:[%s1 + $0x80] sm:$0xff]
    %v52 = vld [vmem:[%s1 + $0x88] sm:$0xff]
    %v53 = vld [vmem:[%s1 + $0x90] sm:$0xff]
    %v54 = vld [vmem:[%s1 + $0x98] sm:$0xff]
    %v55 = vld [vmem:[%s1 + $0xa0] sm:$0xff]
    %v56 = vld [vmem:[%s1 + $0xa8] sm:$0xff]
    %v57 = vld [vmem:[%s1 + $0xb0] sm:$0xff]
    %v58 = vld [vmem:[%s1 + $0xb8] sm:$0xff]
    %v59 = vld [vmem:[%s1 + $0xc0] sm:$0xff]
    %v60 = vld [vmem:[%s1 + $0xc8] sm:$0xff]
    %v61 = vld [vmem:[%s1 + $0xd0] sm:$0xff]
    %v62 = vld [vmem:[%s1 + $0xd8] sm:$0xff]
    %v63 = vld [vmem:[%s1 + $0xe0] sm:$0xff]
    %v64 = vld [vmem:[%s1 + $0xe8] sm:$0xff]
    %v65 = vld [vmem:[%s1 + $0xf0] sm:$0xff]
    %v66 = vld [vmem:[%s1 + $0xf8] sm:$0xff]
    %v67 = vld [vmem:[%s1 + $0x100] sm:$0xff]
    %v68 = vld [vmem:[%s1 + $0x108] sm:$0xff]
    %v69 = vld [vmem:[%s1 + $0x110] sm:$0xff]
    %v70 = vld [vmem:[%s1 + $0x118] sm:$0xff]
    %v71 = vld [vmem:[%s1 + $0x120] sm:$0xff]
    %v72 = vld [vmem:[%s1 + $0x128] sm:$0xff]
    %v73 = vld [vmem:[%s1 + $0x130] sm:$0xff]
    %v74 = vld [vmem:[%s1 + $0x138] sm:$0xff]
    %v75 = vld [vmem:[%s1 + $0x140] sm:$0xff]
    %v76 = vld [vmem:[%s1 + $0x148] sm:$0xff]
    %v77 = vld [vmem:[%s1 + $0x150] sm:$0xff]
    %v78 = vld [vmem:[%s1 + $0x158] sm:$0xff]
    %v79 = vld [vmem:[%s1 + $0x160] sm:$0xff]
    %v80 = vld [vmem:[%s1 + $0x168] sm:$0xff]
    %v81 = vld [vmem:[%s1 + $0x170] sm:$0xff]
    %v82 = vld [vmem:[%s1 + $0x178] sm:$0xff]
    %v83 = vld [vmem:[%s1 + $0x180] sm:$0xff]
    %v84 = vld [vmem:[%s1 + $0x188] sm:$0xff]
    %v85 = vld [vmem:[%s1 + $0x190] sm:$0xff]
    %v86 = vld [vmem:[%s1 + $0x198] sm:$0xff]
    %v87 = vld [vmem:[%s1 + $0x1a0] sm:$0xff]
    %v88 = vld [vmem:[%s1 + $0x1a8] sm:$0xff]
    %v89 = vld [vmem:[%s1 + $0x1b0] sm:$0xff]
    %v90 = vld [vmem:[%s1 + $0x1b8] sm:$0xff]
    %v91 = vld [vmem:[%s1 + $0x1c0] sm:$0xff]
    %v92 = vld [vmem:[%s1 + $0x1c8] sm:$0xff]
    %v93 = vld [vmem:[%s1 + $0x1d0] sm:$0xff]
    %v94 = vld [vmem:[%s1 + $0x1d8] sm:$0xff]
    %v95 = vld [vmem:[%s1 + $0x1e0] sm:$0xff]
    %v96 = vld [vmem:[%s1 + $0x1e8] sm:$0xff]
    %v97 = vld [vmem:[%s1 + $0x1f0] sm:$0xff]
    %v98 = vld [vmem:[%s1 + $0x1f8] sm:$0xff]
    %v99 = vld [vmem:[%s1 + $0x200] sm:$0xff]
    %v100 = vld [vmem:[%s1 + $0x208] sm:$0xff]
    %v101 = vld [vmem:[%s1 + $0x210] sm:$0xff]
    %v102 = vld [vmem:[%s1 + $0x218] sm:$0xff]
    %v103 = vld [vmem:[%s1 + $0x220] sm:$0xff]
    %v104 = vld [vmem:[%s1 + $0x228] sm:$0xff]
    %v105 = vld [vmem:[%s1 + $0x230] sm:$0xff]
    %v106 = vld [vmem:[%s1 + $0x238] sm:$0xff]
    %v107 = vld [vmem:[%s1 + $0x240] sm:$0xff]
    %v108 = vld [vmem:[%s1 + $0x248] sm:$0xff]
    %v109 = vld [vmem:[%s1 + $0x250] sm:$0xff]
    %v110 = vld [vmem:[%s1 + $0x258] sm:$0xff]
    %v111 = vld [vmem:[%s1 + $0x260] sm:$0xff]
    %v112 = vld [vmem:[%s1 + $0x268] sm:$0xff]
    %v113 = vld [vmem:[%s1 + $0x270] sm:$0xff]
    %v114 = vld [vmem:[%s1 + $0x278] sm:$0xff]
    %v115 = vld [vmem:[%s1 + $0x280] sm:$0xff]
    %v116 = vld [vmem:[%s1 + $0x288] sm:$0xff]
    %v117 = vld [vmem:[%s1 + $0x290] sm:$0xff]
    %v118 = vld [vmem:[%s1 + $0x298] sm:$0xff]
    %v119 = vld [vmem:[%s1 + $0x2a0] sm:$0xff]
    %v120 = vld [vmem:[%s1 + $0x2a8] sm:$0xff]
    %v121 = vld [vmem:[%s1 + $0x2b0] sm:$0xff]
    %v122 = vld [vmem:[%s1 + $0x2b8] sm:$0xff]
    %v123 = vld [vmem:[%s1 + $0x2c0] sm:$0xff]
    %v124 = vld [vmem:[%s1 + $0x2c8] sm:$0xff]
    %v125 = vld [vmem:[%s1 + $0x2d0] sm:$0xff]
    %v126 = vld [vmem:[%s1 + $0x2d8] sm:$0xff]
    %v127 = vld [vmem:[%s1 + $0x2e0] sm:$0xff]
    %v128 = vld [vmem:[%s1 + $0x2e8] sm:$0xff]
    %v129 = vld [vmem:[%s1 + $0x2f0] sm:$0xff]
    %v130 = vld [vmem:[%s1 + $0x2f8] sm:$0xff]
    %v131 = vld [vmem:[%s1 + $0x300] sm:$0xff]
    %v132 = vld [vmem:[%s1 + $0x308] sm:$0xff]
    %v133 = vld [vmem:[%s1 + $0x310] sm:$0xff]
    %v134 = vld [vmem:[%s1 + $0x318] sm:$0xff]
    %v135 = vld [vmem:[%s1 + $0x320] sm:$0xff]
    %v136 = vld [vmem:[%s1 + $0x328] sm:$0xff]
    %v137 = vld [vmem:[%s1 + $0x330] sm:$0xff]
    %v138 = vld [vmem:[%s1 + $0x338] sm:$0xff]
    %v139 = vld [vmem:[%s1 + $0x340] sm:$0xff]
    %v140 = vld [vmem:[%s1 + $0x348] sm:$0xff]
    %v141 = vld [vmem:[%s1 + $0x350] sm:$0xff]
    %v142 = vld [vmem:[%s1 + $0x358] sm:$0xff]
    %v143 = vld [vmem:[%s1 + $0x360] sm:$0xff]
    %v144 = vld [vmem:[%s1 + $0x368] sm:$0xff]
    %v145 = vld [vmem:[%s1 + $0x370] sm:$0xff]
    %v146 = vld [vmem:[%s1 + $0x378] sm:$0xff]
    %v147 = vld [vmem:[%s1 + $0x380] sm:$0xff]
    %v148 = vld [vmem:[%s1 + $0x388] sm:$0xff]
    %v149 = vld [vmem:[%s1 + $0x390] sm:$0xff]
    %v150 = vld [vmem:[%s1 + $0x398] sm:$0xff]
    %v151 = vld [vmem:[%s1 + $0x3a0] sm:$0xff]
    %v152 = vld [vmem:[%s1 + $0x3a8] sm:$0xff]
    %v153 = vld [vmem:[%s1 + $0x3b0] sm:$0xff]
    %v154 = vld [vmem:[%s1 + $0x3b8] sm:$0xff]
    %v155 = vld [vmem:[%s1 + $0x3c0] sm:$0xff]
    %v156 = vld [vmem:[%s1 + $0x3c8] sm:$0xff]
    %v157 = vld [vmem:[%s1 + $0x3d0] sm:$0xff]
    %v158 = vld [vmem:[%s1 + $0x3d8] sm:$0xff]
    %v159 = vld [vmem:[%s1 + $0x3e0] sm:$0xff]
    %v160 = vld [vmem:[%s1 + $0x3e8] sm:$0xff]
    %v161 = vld [vmem:[%s1 + $0x3f0] sm:$0xff]
    %v162 = vld [vmem:[%s1 + $0x3f8] sm:$0xff]
    %v163 = vld [vmem:[%s2] sm:$0x1]
    %v165 = vlaneseq
    %v166 = vshrl.u32 %v165, 7
    %v167 = vsub.s32 0, %v166
    %v168 = vrot.slane %v163, %v167
    %v172 = vcombine.high %v33, %v33
    %v174 = vunpack.c.l.s4 1983009808
    %v175 = vunpack.c.0.s8 %v174
    %v176 = vlaneseq
    %v177 = vshrl.u32 %v176, 7
    %v178 = vsub.s32 %v175, %v177
    %v179 = vrot.slane %v33, %v178
    %v181 = vunpack.c.l.s4 1983009808
    %v182 = vunpack.c.0.s8 %v181
    %v183 = vlaneseq
    %v184 = vshrl.u32 %v183, 7
    %v185 = vsub.s32 %v182, %v184
    %v186 = vrot.slane %v172, %v185
    %v187 = vcombine.high %v179, %v179
    %v188 = vcombine.high %v186, %v186
    %v189 = vcombine.high %v34, %v34
    %v191 = vunpack.c.l.s4 1983009808
    %v192 = vunpack.c.0.s8 %v191
    %v193 = vlaneseq
    %v194 = vshrl.u32 %v193, 7
    %v195 = vsub.s32 %v192, %v194
    %v196 = vrot.slane %v34, %v195
    %v198 = vunpack.c.l.s4 1983009808
    %v199 = vunpack.c.0.s8 %v198
    %v200 = vlaneseq
    %v201 = vshrl.u32 %v200, 7
    %v202 = vsub.s32 %v199, %v201
    %v203 = vrot.slane %v189, %v202
    %v204 = vcombine.high %v196, %v196
    %v205 = vcombine.high %v203, %v203
    %214 = vmatprep.subr.mxu0 0.0
    %215 = vmatpush1.msra.mxu0 %v35
    %216 = vmatprep.subr.mxu0 0.0
    %217 = vmatpush1.msra.mxu0 %v36
    %218 = vmatprep.subr.mxu0 0.0
    %219 = vmatpush1.msra.mxu0 %v37
    %220 = vmatprep.subr.mxu0 0.0
    %221 = vmatpush1.msra.mxu0 %v38
    %222 = vmatprep.subr.mxu0 0.0
    %223 = vmatpush1.msra.mxu0 %v39
    %224 = vmatprep.subr.mxu0 0.0
    %225 = vmatpush1.msra.mxu0 %v40
    %226 = vmatprep.subr.mxu0 0.0
    %227 = vmatpush1.msra.mxu0 %v41
    %228 = vmatprep.subr.mxu0 0.0
    %229 = vmatpush1.msra.mxu0 %v42
    %230 = vmatprep.subr.mxu0 0.0
    %231 = vmatpush1.msra.mxu0 %v43
    %232 = vmatprep.subr.mxu0 0.0
    %233 = vmatpush1.msra.mxu0 %v44
    %234 = vmatprep.subr.mxu0 0.0
    %235 = vmatpush1.msra.mxu0 %v45
    %236 = vmatprep.subr.mxu0 0.0
    %237 = vmatpush1.msra.mxu0 %v46
    %238 = vmatprep.subr.mxu0 0.0
    %239 = vmatpush1.msra.mxu0 %v47
    %240 = vmatprep.subr.mxu0 0.0
    %241 = vmatpush1.msra.mxu0 %v48
    %242 = vmatprep.subr.mxu0 0.0
    %243 = vmatpush1.msra.mxu0 %v49
    %244 = vmatprep.subr.mxu0 0.0
    %245 = vmatpush1.msra.mxu0 %v50
    %246 = vmatprep.subr.mxu0 0.0
    %247 = vmatpush1.msra.mxu0 %v51
    %248 = vmatprep.subr.mxu0 0.0
    %249 = vmatpush1.msra.mxu0 %v52
    %250 = vmatprep.subr.mxu0 0.0
    %251 = vmatpush1.msra.mxu0 %v53
    %252 = vmatprep.subr.mxu0 0.0
    %253 = vmatpush1.msra.mxu0 %v54
    %254 = vmatprep.subr.mxu0 0.0
    %255 = vmatpush1.msra.mxu0 %v55
    %256 = vmatprep.subr.mxu0 0.0
    %257 = vmatpush1.msra.mxu0 %v56
    %258 = vmatprep.subr.mxu0 0.0
    %259 = vmatpush1.msra.mxu0 %v57
    %260 = vmatprep.subr.mxu0 0.0
    %261 = vmatpush1.msra.mxu0 %v58
    %262 = vmatprep.subr.mxu0 0.0
    %263 = vmatpush1.msra.mxu0 %v59
    %264 = vmatprep.subr.mxu0 0.0
    %265 = vmatpush1.msra.mxu0 %v60
    %266 = vmatprep.subr.mxu0 0.0
    %267 = vmatpush1.msra.mxu0 %v61
    %268 = vmatprep.subr.mxu0 0.0
    %269 = vmatpush1.msra.mxu0 %v62
    %270 = vmatprep.subr.mxu0 0.0
    %271 = vmatpush1.msra.mxu0 %v63
    %272 = vmatprep.subr.mxu0 0.0
    %273 = vmatpush1.msra.mxu0 %v64
    %274 = vmatprep.subr.mxu0 0.0
    %275 = vmatpush1.msra.mxu0 %v65
    %276 = vmatprep.subr.mxu0 0.0
    %277 = vmatpush1.msra.mxu0 %v66
    %278 = vmatprep.mubr.f32.mxu0 %v187
    %279 = vmatmul.mubr.f32.gmra.mrb[0].mxu0 %v179
    %v280 = vpop.f32.mrb[0].mxu0
    %v281 = vadd.f32 %v168, %v280
    %v282 = vpop.f32.mrb[0].mxu0
    %283 = vdwg.mxu0
    %284 = vmatprep.subr.mxu0 0.0
    %285 = vmatpush1.msra.mxu0 %v67
    %286 = vmatprep.subr.mxu0 0.0
    %287 = vmatpush1.msra.mxu0 %v68
    %288 = vmatprep.subr.mxu0 0.0
    %289 = vmatpush1.msra.mxu0 %v69
    %290 = vmatprep.subr.mxu0 0.0
    %291 = vmatpush1.msra.mxu0 %v70
    %292 = vmatprep.subr.mxu0 0.0
    %293 = vmatpush1.msra.mxu0 %v71
    %294 = vmatprep.subr.mxu0 0.0
    %295 = vmatpush1.msra.mxu0 %v72
    %296 = vmatprep.subr.mxu0 0.0
    %297 = vmatpush1.msra.mxu0 %v73
    %298 = vmatprep.subr.mxu0 0.0
    %299 = vmatpush1.msra.mxu0 %v74
    %300 = vmatprep.subr.mxu0 0.0
    %301 = vmatpush1.msra.mxu0 %v75
    %302 = vmatprep.subr.mxu0 0.0
    %303 = vmatpush1.msra.mxu0 %v76
    %304 = vmatprep.subr.mxu0 0.0
    %305 = vmatpush1.msra.mxu0 %v77
    %306 = vmatprep.subr.mxu0 0.0
    %307 = vmatpush1.msra.mxu0 %v78
    %308 = vmatprep.subr.mxu0 0.0
    %309 = vmatpush1.msra.mxu0 %v79
    %310 = vmatprep.subr.mxu0 0.0
    %311 = vmatpush1.msra.mxu0 %v80
    %312 = vmatprep.subr.mxu0 0.0
    %313 = vmatpush1.msra.mxu0 %v81
    %314 = vmatprep.subr.mxu0 0.0
    %315 = vmatpush1.msra.mxu0 %v82
    %316 = vmatprep.subr.mxu0 0.0
    %317 = vmatpush1.msra.mxu0 %v83
    %318 = vmatprep.subr.mxu0 0.0
    %319 = vmatpush1.msra.mxu0 %v84
    %320 = vmatprep.subr.mxu0 0.0
    %321 = vmatpush1.msra.mxu0 %v85
    %322 = vmatprep.subr.mxu0 0.0
    %323 = vmatpush1.msra.mxu0 %v86
    %324 = vmatprep.subr.mxu0 0.0
    %325 = vmatpush1.msra.mxu0 %v87
    %326 = vmatprep.subr.mxu0 0.0
    %327 = vmatpush1.msra.mxu0 %v88
    %328 = vmatprep.subr.mxu0 0.0
    %329 = vmatpush1.msra.mxu0 %v89
    %330 = vmatprep.subr.mxu0 0.0
    %331 = vmatpush1.msra.mxu0 %v90
    %332 = vmatprep.subr.mxu0 0.0
    %333 = vmatpush1.msra.mxu0 %v91
    %334 = vmatprep.subr.mxu0 0.0
    %335 = vmatpush1.msra.mxu0 %v92
    %336 = vmatprep.subr.mxu0 0.0
    %337 = vmatpush1.msra.mxu0 %v93
    %338 = vmatprep.subr.mxu0 0.0
    %339 = vmatpush1.msra.mxu0 %v94
    %340 = vmatprep.subr.mxu0 0.0
    %341 = vmatpush1.msra.mxu0 %v95
    %342 = vmatprep.subr.mxu0 0.0
    %343 = vmatpush1.msra.mxu0 %v96
    %344 = vmatprep.subr.mxu0 0.0
    %345 = vmatpush1.msra.mxu0 %v97
    %346 = vmatprep.subr.mxu0 0.0
    %347 = vmatpush1.msra.mxu0 %v98
    %348 = vmatprep.mubr.f32.mxu0 %v188
    %349 = vmatmul.mubr.f32.gmra.mrb[0].mxu0 %v186
    %v350 = vpop.f32.mrb[0].mxu0
    %v351 = vadd.f32 %v281, %v350
    %v352 = vpop.f32.mrb[0].mxu0
    %353 = vdwg.mxu0
    %354 = vmatprep.subr.mxu0 0.0
    %355 = vmatpush1.msra.mxu0 %v99
    %356 = vmatprep.subr.mxu0 0.0
    %357 = vmatpush1.msra.mxu0 %v100
    %358 = vmatprep.subr.mxu0 0.0
    %359 = vmatpush1.msra.mxu0 %v101
    %360 = vmatprep.subr.mxu0 0.0
    %361 = vmatpush1.msra.mxu0 %v102
    %362 = vmatprep.subr.mxu0 0.0
    %363 = vmatpush1.msra.mxu0 %v103
    %364 = vmatprep.subr.mxu0 0.0
    %365 = vmatpush1.msra.mxu0 %v104
    %366 = vmatprep.subr.mxu0 0.0
    %367 = vmatpush1.msra.mxu0 %v105
    %368 = vmatprep.subr.mxu0 0.0
    %369 = vmatpush1.msra.mxu0 %v106
    %370 = vmatprep.subr.mxu0 0.0
    %371 = vmatpush1.msra.mxu0 %v107
    %372 = vmatprep.subr.mxu0 0.0
    %373 = vmatpush1.msra.mxu0 %v108
    %374 = vmatprep.subr.mxu0 0.0
    %375 = vmatpush1.msra.mxu0 %v109
    %376 = vmatprep.subr.mxu0 0.0
    %377 = vmatpush1.msra.mxu0 %v110
    %378 = vmatprep.subr.mxu0 0.0
    %379 = vmatpush1.msra.mxu0 %v111
    %380 = vmatprep.subr.mxu0 0.0
    %381 = vmatpush1.msra.mxu0 %v112
    %382 = vmatprep.subr.mxu0 0.0
    %383 = vmatpush1.msra.mxu0 %v113
    %384 = vmatprep.subr.mxu0 0.0
    %385 = vmatpush1.msra.mxu0 %v114
    %386 = vmatprep.subr.mxu0 0.0
    %387 = vmatpush1.msra.mxu0 %v115
    %388 = vmatprep.subr.mxu0 0.0
    %389 = vmatpush1.msra.mxu0 %v116
    %390 = vmatprep.subr.mxu0 0.0
    %391 = vmatpush1.msra.mxu0 %v117
    %392 = vmatprep.subr.mxu0 0.0
    %393 = vmatpush1.msra.mxu0 %v118
    %394 = vmatprep.subr.mxu0 0.0
    %395 = vmatpush1.msra.mxu0 %v119
    %396 = vmatprep.subr.mxu0 0.0
    %397 = vmatpush1.msra.mxu0 %v120
    %398 = vmatprep.subr.mxu0 0.0
    %399 = vmatpush1.msra.mxu0 %v121
    %400 = vmatprep.subr.mxu0 0.0
    %401 = vmatpush1.msra.mxu0 %v122
    %402 = vmatprep.subr.mxu0 0.0
    %403 = vmatpush1.msra.mxu0 %v123
    %404 = vmatprep.subr.mxu0 0.0
    %405 = vmatpush1.msra.mxu0 %v124
    %406 = vmatprep.subr.mxu0 0.0
    %407 = vmatpush1.msra.mxu0 %v125
    %408 = vmatprep.subr.mxu0 0.0
    %409 = vmatpush1.msra.mxu0 %v126
    %410 = vmatprep.subr.mxu0 0.0
    %411 = vmatpush1.msra.mxu0 %v127
    %412 = vmatprep.subr.mxu0 0.0
    %413 = vmatpush1.msra.mxu0 %v128
    %414 = vmatprep.subr.mxu0 0.0
    %415 = vmatpush1.msra.mxu0 %v129
    %416 = vmatprep.subr.mxu0 0.0
    %417 = vmatpush1.msra.mxu0 %v130
    %418 = vmatprep.mubr.f32.mxu0 %v204
    %419 = vmatmul.mubr.f32.gmra.mrb[0].mxu0 %v196
    %v420 = vpop.f32.mrb[0].mxu0
    %v421 = vadd.f32 %v351, %v420
    %v422 = vpop.f32.mrb[0].mxu0
    %423 = vdwg.mxu0
    %424 = vmatprep.subr.mxu0 0.0
    %425 = vmatpush1.msra.mxu0 %v131
    %426 = vmatprep.subr.mxu0 0.0
    %427 = vmatpush1.msra.mxu0 %v132
    %428 = vmatprep.subr.mxu0 0.0
    %429 = vmatpush1.msra.mxu0 %v133
    %430 = vmatprep.subr.mxu0 0.0
    %431 = vmatpush1.msra.mxu0 %v134
    %432 = vmatprep.subr.mxu0 0.0
    %433 = vmatpush1.msra.mxu0 %v135
    %434 = vmatprep.subr.mxu0 0.0
    %435 = vmatpush1.msra.mxu0 %v136
    %436 = vmatprep.subr.mxu0 0.0
    %437 = vmatpush1.msra.mxu0 %v137
    %438 = vmatprep.subr.mxu0 0.0
    %439 = vmatpush1.msra.mxu0 %v138
    %440 = vmatprep.subr.mxu0 0.0
    %441 = vmatpush1.msra.mxu0 %v139
    %442 = vmatprep.subr.mxu0 0.0
    %443 = vmatpush1.msra.mxu0 %v140
    %444 = vmatprep.subr.mxu0 0.0
    %445 = vmatpush1.msra.mxu0 %v141
    %446 = vmatprep.subr.mxu0 0.0
    %447 = vmatpush1.msra.mxu0 %v142
    %448 = vmatprep.subr.mxu0 0.0
    %449 = vmatpush1.msra.mxu0 %v143
    %450 = vmatprep.subr.mxu0 0.0
    %451 = vmatpush1.msra.mxu0 %v144
    %452 = vmatprep.subr.mxu0 0.0
    %453 = vmatpush1.msra.mxu0 %v145
    %454 = vmatprep.subr.mxu0 0.0
    %455 = vmatpush1.msra.mxu0 %v146
    %456 = vmatprep.subr.mxu0 0.0
    %457 = vmatpush1.msra.mxu0 %v147
    %458 = vmatprep.subr.mxu0 0.0
    %459 = vmatpush1.msra.mxu0 %v148
    %460 = vmatprep.subr.mxu0 0.0
    %461 = vmatpush1.msra.mxu0 %v149
    %462 = vmatprep.subr.mxu0 0.0
    %463 = vmatpush1.msra.mxu0 %v150
    %464 = vmatprep.subr.mxu0 0.0
    %465 = vmatpush1.msra.mxu0 %v151
    %466 = vmatprep.subr.mxu0 0.0
    %467 = vmatpush1.msra.mxu0 %v152
    %468 = vmatprep.subr.mxu0 0.0
    %469 = vmatpush1.msra.mxu0 %v153
    %470 = vmatprep.subr.mxu0 0.0
    %471 = vmatpush1.msra.mxu0 %v154
    %472 = vmatprep.subr.mxu0 0.0
    %473 = vmatpush1.msra.mxu0 %v155
    %474 = vmatprep.subr.mxu0 0.0
    %475 = vmatpush1.msra.mxu0 %v156
    %476 = vmatprep.subr.mxu0 0.0
    %477 = vmatpush1.msra.mxu0 %v157
    %478 = vmatprep.subr.mxu0 0.0
    %479 = vmatpush1.msra.mxu0 %v158
    %480 = vmatprep.subr.mxu0 0.0
    %481 = vmatpush1.msra.mxu0 %v159
    %482 = vmatprep.subr.mxu0 0.0
    %483 = vmatpush1.msra.mxu0 %v160
    %484 = vmatprep.subr.mxu0 0.0
    %485 = vmatpush1.msra.mxu0 %v161
    %486 = vmatprep.subr.mxu0 0.0
    %487 = vmatpush1.msra.mxu0 %v162
    %488 = vmatprep.mubr.f32.mxu0 %v205
    %489 = vmatmul.mubr.f32.gmra.mrb[0].mxu0 %v203
    %v490 = vpop.f32.mrb[0].mxu0
    %v491 = vadd.f32 %v421, %v490
    %v492 = vpop.f32.mrb[0].mxu0
    %493 = vdwg.mxu0
    %vm494 = vcmask 1041408
    %v495 = vsel %vm494, %v491, 0.0
    %v496 = vrot.slane %v495, 4
    %v497 = vadd.f32 %v495, %v496
    %v498 = vrot.slane %v497, 2
    %v499 = vadd.f32 %v497, %v498
    %v500 = vrot.slane %v499, 1
    %v501 = vadd.f32 %v499, %v500
    %v502 = vrcp.pop 2.0
    %v503 = vmul.f32 %v501, %v502
    %v504 = vsub.f32 %v491, %v503
    %v505 = vmul.f32 %v504, %v504
    %v506 = vsel %vm494, %v505, 0.0
    %v507 = vrot.slane %v506, 4
    %v508 = vadd.f32 %v506, %v507
    %v509 = vrot.slane %v508, 2
    %v510 = vadd.f32 %v508, %v509
    %v511 = vrot.slane %v510, 1
    %v512 = vadd.f32 %v510, %v511
    %v513 = vmul.f32 %v512, %v502
    %v514 = vadd.f32 %v513, 1e-05
    %v515 = vrsqrt.pop %v514
    %v516 = vmul.f32 %v504, %v515
    %v517 = vld [vmem:[%s3] sm:$0x1]
    %v519 = vlaneseq
    %v520 = vshrl.u32 %v519, 7
    %v521 = vsub.s32 0, %v520
    %v522 = vrot.slane %v517, %v521
    %v524 = vmul.f32 %v516, %v522
    %v525 = vld [vmem:[%s4] sm:$0x1]
    %v527 = vlaneseq
    %v528 = vshrl.u32 %v527, 7
    %v529 = vsub.s32 0, %v528
    %v530 = vrot.slane %v525, %v529
    %v532 = vadd.f32 %v524, %v530
    %v533 = vmax.f32 %v532, 0.0
    %v534 = vld [vmem:[%s5] sm:$0xff]
    %v535 = vld [vmem:[%s5 + $0x8] sm:$0xff]
    %v536 = vld [vmem:[%s5 + $0x10] sm:$0xff]
    %v537 = vld [vmem:[%s5 + $0x18] sm:$0xff]
    %v538 = vld [vmem:[%s5 + $0x20] sm:$0xff]
    %v539 = vld [vmem:[%s5 + $0x28] sm:$0xff]
    %v540 = vld [vmem:[%s5 + $0x30] sm:$0xff]
    %v541 = vld [vmem:[%s5 + $0x38] sm:$0xff]
    %v542 = vld [vmem:[%s5 + $0x40] sm:$0xff]
    %v543 = vld [vmem:[%s5 + $0x48] sm:$0xff]
    %v544 = vld [vmem:[%s5 + $0x50] sm:$0xff]
    %v545 = vld [vmem:[%s5 + $0x58] sm:$0xff]
    %v546 = vld [vmem:[%s5 + $0x60] sm:$0xff]
    %v547 = vld [vmem:[%s5 + $0x68] sm:$0xff]
    %v548 = vld [vmem:[%s5 + $0x70] sm:$0xff]
    %v549 = vld [vmem:[%s5 + $0x78] sm:$0xff]
    %v550 = vld [vmem:[%s6] sm:$0x1]
    %v552 = vlaneseq
    %v553 = vshrl.u32 %v552, 7
    %v554 = vsub.s32 0, %v553
    %v555 = vrot.slane %v550, %v554
    %557 = vmatprep.subr.mxu0 0.0
    %558 = vmatpush1.msra.mxu0 %v534
    %559 = vmatprep.subr.mxu0 0.0
    %560 = vmatpush1.msra.mxu0 %v535
    %561 = vmatprep.subr.mxu0 0.0
    %562 = vmatpush1.msra.mxu0 %v536
    %563 = vmatprep.subr.mxu0 0.0
    %564 = vmatpush1.msra.mxu0 %v537
    %565 = vmatprep.subr.mxu0 0.0
    %566 = vmatpush1.msra.mxu0 %v538
    %567 = vmatprep.subr.mxu0 0.0
    %568 = vmatpush1.msra.mxu0 %v539
    %569 = vmatprep.subr.mxu0 0.0
    %570 = vmatpush1.msra.mxu0 %v540
    %571 = vmatprep.subr.mxu0 0.0
    %572 = vmatpush1.msra.mxu0 %v541
    %573 = vmatprep.subr.mxu0 0.0
    %574 = vmatpush1.msra.mxu0 %v542
    %575 = vmatprep.subr.mxu0 0.0
    %576 = vmatpush1.msra.mxu0 %v543
    %577 = vmatprep.subr.mxu0 0.0
    %578 = vmatpush1.msra.mxu0 %v544
    %579 = vmatprep.subr.mxu0 0.0
    %580 = vmatpush1.msra.mxu0 %v545
    %581 = vmatprep.subr.mxu0 0.0
    %582 = vmatpush1.msra.mxu0 %v546
    %583 = vmatprep.subr.mxu0 0.0
    %584 = vmatpush1.msra.mxu0 %v547
    %585 = vmatprep.subr.mxu0 0.0
    %586 = vmatpush1.msra.mxu0 %v548
    %587 = vmatprep.subr.mxu0 0.0
    %588 = vmatpush1.msra.mxu0 %v549
    %589 = vmatprep.subr.mxu0 0.0
    %590 = vmatpush1.msra.mxu0 0.0
    %591 = vmatprep.subr.mxu0 0.0
    %592 = vmatpush1.msra.mxu0 0.0
    %593 = vmatprep.subr.mxu0 0.0
    %594 = vmatpush1.msra.mxu0 0.0
    %595 = vmatprep.subr.mxu0 0.0
    %596 = vmatpush1.msra.mxu0 0.0
    %597 = vmatprep.subr.mxu0 0.0
    %598 = vmatpush1.msra.mxu0 0.0
    %599 = vmatprep.subr.mxu0 0.0
    %600 = vmatpush1.msra.mxu0 0.0
    %601 = vmatprep.subr.mxu0 0.0
    %602 = vmatpush1.msra.mxu0 0.0
    %603 = vmatprep.subr.mxu0 0.0
    %604 = vmatpush1.msra.mxu0 0.0
    %605 = vmatprep.subr.mxu0 0.0
    %606 = vmatpush1.msra.mxu0 0.0
    %607 = vmatprep.subr.mxu0 0.0
    %608 = vmatpush1.msra.mxu0 0.0
    %609 = vmatprep.subr.mxu0 0.0
    %610 = vmatpush1.msra.mxu0 0.0
    %611 = vmatprep.subr.mxu0 0.0
    %612 = vmatpush1.msra.mxu0 0.0
    %613 = vmatprep.subr.mxu0 0.0
    %614 = vmatpush1.msra.mxu0 0.0
    %615 = vmatprep.subr.mxu0 0.0
    %616 = vmatpush1.msra.mxu0 0.0
    %617 = vmatprep.subr.mxu0 0.0
    %618 = vmatpush1.msra.mxu0 0.0
    %619 = vmatprep.subr.mxu0 0.0
    %620 = vmatpush1.msra.mxu0 0.0
    %621 = vmatprep.mubr.f32.mxu0 0.0
    %622 = vmatmul.mubr.f32.gmra.mrb[0].mxu0 %v533
    %v623 = vpop.f32.mrb[0].mxu0
    %v624 = vadd.f32 %v555, %v623
    %v625 = vpop.f32.mrb[0].mxu0
    %626 = vdwg.mxu0
    %v627 = vsel %vm494, %v624, 0.0
    %v628 = vrot.slane %v627, 4
    %v629 = vadd.f32 %v627, %v628
    %v630 = vrot.slane %v629, 2
    %v631 = vadd.f32 %v629, %v630
    %v632 = vrot.slane %v631, 1
    %v633 = vadd.f32 %v631, %v632
    %v634 = vmul.f32 %v633, %v502
    %v635 = vsub.f32 %v624, %v634
    %v636 = vmul.f32 %v635, %v635
    %v637 = vsel %vm494, %v636, 0.0
    %v638 = vrot.slane %v637, 4
    %v639 = vadd.f32 %v637, %v638
    %v640 = vrot.slane %v639, 2
    %v641 = vadd.f32 %v639, %v640
    %v642 = vrot.slane %v641, 1
    %v643 = vadd.f32 %v641, %v642
    %v644 = vmul.f32 %v643, %v502
    %v645 = vadd.f32 %v644, 1e-05
    %v646 = vrsqrt.pop %v645
    %v647 = vmul.f32 %v635, %v646
    %v648 = vld [vmem:[%s7] sm:$0x1]
    %v650 = vlaneseq
    %v651 = vshrl.u32 %v650, 7
    %v652 = vsub.s32 0, %v651
    %v653 = vrot.slane %v648, %v652
    %v655 = vmul.f32 %v647, %v653
    %v656 = vld [vmem:[%s8] sm:$0x1]
    %v658 = vlaneseq
    %v659 = vshrl.u32 %v658, 7
    %v660 = vsub.s32 0, %v659
    %v661 = vrot.slane %v656, %v660
    %v663 = vadd.f32 %v655, %v661
    %v664 = vmax.f32 %v663, 0.0
    %v665 = vlaneseq
    %v666 = vand.u32 %v665, 127
    %vm667 = vcmp.lt.s32.totalorder %v666, 84
    %v668 = vsel %vm667, %v664, -inf
    %v669 = vsel %vm494, %v668, -inf
    %670 = vmax.xlane.f32.xlu0 %v669
    %v671 = vpop.xlane.xlu0 %670
    %v672 = vsub.f32 %v668, %v671
    %v673 = vmul.f32 %v672, 1.442695
    %v674 = vpow.pop %v673
    %v675 = vsel %vm494, %v674, 0.0
    %676 = vadd.xlane.f32.xlu0 %v675
    %v677 = vpop.xlane.xlu0 %676
    %v678 = vrcp.pop %v677
    %v679 = vmul.f32 %v674, %v678
    %680 = vst [vmem:[#allocation2] sm:$0x3] %v679
    // Predicated region
    $region38: #{net_forward.5} parent=1 // pred_check
      _
    $region39: #{net_forward.5} parent=1 // pred_check_branch
      %682 = sbr.rel (0) target = $region41
    $region40: #{net_forward.5} parent=1 // pred_region
      %s684 = ssub.s32 32, 32
      %685 = vsyncadd [#allocation3], %s684
      %s687 = sshll.u32 [#allocation2], 4
      %s688 = int_to_ptr.vmem [resolvable:$true] %s687
      %690 = dma.vmem_to_hbm [thread:$0]  %s688, 32, %s9, [#allocation3]
    $region41: #{net_forward.5} parent=1 // pred_fallthru
      _
    // Predicated region
    $region42: #{net_forward.5} parent=1 // pred_check
      _
    $region43: #{net_forward.5} parent=1 // pred_check_branch
      %692 = sbr.rel (0) target = $region45
    $region44: #{net_forward.5} parent=1 // pred_region
      %693 = dma.done [#allocation3], 32
    $region45: #{net_forward.5} parent=1 // pred_fallthru
      _
    %694 = vsyncpa [#allocation3], 1

</llo_original>
